<compile_context>
chip_gen: v7x
topology: tpu7x:2x2x1
jax: 0.10.0
libtpu: 0.0.40
codegen_flags: <defaults>
</compile_context>

<pallas_src>
import jax
import jax.numpy as jnp
from jax.experimental import pallas as pl
from jax.experimental.pallas import tpu as pltpu


# --------------------------------------------------------------------------
# Kernels
# --------------------------------------------------------------------------

_SQRT_2_OVER_PI = 0.7978845608028654
_C1 = _SQRT_2_OVER_PI                      # sqrt(2/pi)
_C3 = 0.044715 * _SQRT_2_OVER_PI           # sqrt(2/pi) * 0.044715


def _gelu_tanh_f32(h):
    # 0.5*h*(1 + tanh(sqrt(2/pi)*(h + 0.044715*h^3))), factored so only two
    # multiplies feed the EUP tanh: inner = h * (c1 + c3*h*h).
    inner = h * (_C1 + _C3 * h * h)
    return 0.5 * h * (1.0 + jnp.tanh(inner))


def mlp_kernel_fused(x_ref, wfc_ref, bfc_ref, wproj_ref, bproj_ref, o_ref):
    # Full H resident in VMEM: single pass, no accumulator scratch.
    # x_ref: (tm, D), wfc_ref: (D, H), bfc_ref: (1, H),
    # wproj_ref: (H, D), bproj_ref: (1, D), o_ref: (tm, D)
    h = jnp.dot(x_ref[...], wfc_ref[...], preferred_element_type=jnp.float32)
    h = h + bfc_ref[...].astype(jnp.float32)
    g = _gelu_tanh_f32(h)
    y = jnp.dot(g.astype(wproj_ref.dtype), wproj_ref[...],
                preferred_element_type=jnp.float32)
    o_ref[...] = (y + bproj_ref[...].astype(jnp.float32)).astype(o_ref.dtype)


def mlp_kernel_chunked(x_ref, wfc_ref, bfc_ref, wproj_ref, bproj_ref,
                       o_ref, acc_ref):
    # Hidden dim streamed in (D, th)/(th, D) chunks, f32 accumulator resident
    # across the "arbitrary" H axis (reduction axis last).
    j = pl.program_id(1)

    @pl.when(j == 0)
    def _():
        acc_ref[...] = jnp.zeros_like(acc_ref)

    h = jnp.dot(x_ref[...], wfc_ref[...], preferred_element_type=jnp.float32)
    h = h + bfc_ref[...].astype(jnp.float32)
    g = _gelu_tanh_f32(h)
    acc_ref[...] += jnp.dot(g.astype(wproj_ref.dtype), wproj_ref[...],
                            preferred_element_type=jnp.float32)

    @pl.when(j == pl.num_programs(1) - 1)
    def _():
        o_ref[...] = (acc_ref[...] +
                      bproj_ref[...].astype(jnp.float32)).astype(o_ref.dtype)


# --------------------------------------------------------------------------
# Tiling / budget helpers
# --------------------------------------------------------------------------

def _round_up(v, m):
    return ((v + m - 1) // m) * m


def _vmem_budget_bytes():
    """Per-generation VMEM budget with ~20% headroom (compiler scratch etc.)."""
    try:
        cap = int(pltpu.get_tpu_info().vmem_capacity_bytes)
    except Exception:
        cap = 64 * 1024 * 1024  # conservative fallback (v7x-sized)
    return int(cap * 0.80)


def _pick_row_tile(M, tm_target, align=256):
    """Row tile: multiple of `align` (MXU-filling); guarantee >=2 tiles on the
    parallel axis when possible so both v7x TensorCores get work."""
    if M <= align:
        # Tiny M (e.g. decode): one padded tile, >=16 sublanes for bf16 packing.
        return max(16, _round_up(M, 16))
    tm = max(align, min(_round_up(tm_target, align), _round_up(M, align)))
    if pl.cdiv(M, tm) < 2:
        tm = max(align, _round_up(pl.cdiv(M, 2), align))
    return tm


def _fused_fits(D, H, tm, itemsize, budget):
    # Conservatively assume the pipeline double-buffers everything.
    w_bytes = 2 * (D * H + H * D) * itemsize
    act_bytes = 2 * (tm * D) * itemsize * 2          # in + out tiles
    misc = 2 * (H + D) * itemsize + (1 << 20)
    return w_bytes + act_bytes + misc <= budget


def _pick_hidden_chunk(D, H, tm, itemsize, budget, target):
    """Largest th (multiple of 128, <= target) whose double-buffered weight
    chunks fit the VMEM budget.  H is later zero-padded to a multiple of th."""
    fixed = 2 * (tm * D) * itemsize * 2 + tm * D * 4 + 2 * D * itemsize + (1 << 20)
    per_th = (4 * D + 2) * itemsize                  # 2x(D,th) + 2x(th,D) + 2x bfc
    avail = budget - fixed
    th_max = avail // per_th if avail > 0 else 0
    th = min(int(target), H, int(th_max))
    th = max(128, (th // 128) * 128)
    return th


# --------------------------------------------------------------------------
# Wrapper
# --------------------------------------------------------------------------

def mlp_pallas(x, w_fc, b_fc, w_proj, b_proj, *, tm=512, th=512,
               allow_fused=True):
    """Fused GPT MLP forward: y = GELU_tanh(x @ W_fc + b_fc) @ W_proj + b_proj.

    x:      (B, T, D)
    w_fc:   (D, H)   (transposed vs. torch.nn.Linear.weight)
    b_fc:   (H,)
    w_proj: (H, D)
    b_proj: (D,)
    """
    B, T, D = x.shape
    H = w_fc.shape[1]
    M = B * T

    x2 = x.reshape(M, D)
    b_fc2 = b_fc.reshape(1, H)
    b_proj2 = b_proj.reshape(1, D)

    itemsize = jnp.dtype(x.dtype).itemsize
    w_itemsize = jnp.dtype(w_fc.dtype).itemsize
    budget = _vmem_budget_bytes()

    tm = _pick_row_tile(M, tm)
    n_row_tiles = pl.cdiv(M, tm)

    use_fused = allow_fused and _fused_fits(D, H, tm, w_itemsize, budget)

    flops = 4 * M * D * H
    act_bytes = 2 * M * D * itemsize
    w_total = (w_fc.size + w_proj.size + b_fc.size + b_proj.size) * w_itemsize

    if use_fused:
        # ---- 1-D grid over rows; full weights resident in VMEM. ----
        cost = pl.CostEstimate(flops=flops, transcendentals=M * H,
                               bytes_accessed=act_bytes + w_total)
        out = pl.pallas_call(
            mlp_kernel_fused,
            out_shape=jax.ShapeDtypeStruct((M, D), x.dtype),
            grid_spec=pltpu.PrefetchScalarGridSpec(
                num_scalar_prefetch=0,
                grid=(n_row_tiles,),
                in_specs=[
                    pl.BlockSpec((tm, D), lambda i: (i, 0)),   # x rows
                    pl.BlockSpec((D, H), lambda i: (0, 0)),    # W_fc (full)
                    pl.BlockSpec((1, H), lambda i: (0, 0)),    # b_fc
                    pl.BlockSpec((H, D), lambda i: (0, 0)),    # W_proj (full)
                    pl.BlockSpec((1, D), lambda i: (0, 0)),    # b_proj
                ],
                out_specs=pl.BlockSpec((tm, D), lambda i: (i, 0)),
            ),
            compiler_params=pltpu.CompilerParams(
                dimension_semantics=("parallel",),
                vmem_limit_bytes=budget,
            ),
            cost_estimate=cost,
        )(x2, w_fc, b_fc2, w_proj, b_proj2)
        return out.reshape(B, T, D)

    # ---- Chunked path: stream the hidden dim, accumulate in f32 VMEM. ----
    th = _pick_hidden_chunk(D, H, tm, w_itemsize, budget, target=th)
    H_pad = _round_up(H, th)
    if H_pad != H:
        # Zero-padded hidden units contribute exactly 0 to the output.
        w_fc = jnp.pad(w_fc, ((0, 0), (0, H_pad - H)))
        b_fc2 = jnp.pad(b_fc2, ((0, 0), (0, H_pad - H)))
        w_proj = jnp.pad(w_proj, ((0, H_pad - H), (0, 0)))

    grid = (n_row_tiles, H_pad // th)

    cost = pl.CostEstimate(
        flops=flops, transcendentals=M * H,
        bytes_accessed=act_bytes + n_row_tiles * w_total,  # weights re-streamed
    )

    out = pl.pallas_call(
        mlp_kernel_chunked,
        out_shape=jax.ShapeDtypeStruct((M, D), x.dtype),
        grid_spec=pltpu.PrefetchScalarGridSpec(
            num_scalar_prefetch=0,
            grid=grid,
            in_specs=[
                pl.BlockSpec((tm, D), lambda i, j: (i, 0)),    # x rows
                pl.BlockSpec((D, th), lambda i, j: (0, j)),    # W_fc chunk
                pl.BlockSpec((1, th), lambda i, j: (0, j)),    # b_fc chunk
                pl.BlockSpec((th, D), lambda i, j: (j, 0)),    # W_proj chunk
                pl.BlockSpec((1, D), lambda i, j: (0, 0)),     # b_proj
            ],
            out_specs=pl.BlockSpec((tm, D), lambda i, j: (i, 0)),
            scratch_shapes=[pltpu.VMEM((tm, D), jnp.float32)],
        ),
        compiler_params=pltpu.CompilerParams(
            dimension_semantics=("parallel", "arbitrary"),
            vmem_limit_bytes=budget,
        ),
        cost_estimate=cost,
    )(x2, w_fc, b_fc2, w_proj, b_proj2)
    return out.reshape(B, T, D)


# --------------------------------------------------------------------------
# Reference + test
# --------------------------------------------------------------------------

def mlp_reference(x, w_fc, b_fc, w_proj, b_proj):
    h = jnp.einsum("btd,dh->bth", x, w_fc) + b_fc
    g = 0.5 * h * (1.0 + jnp.tanh(_SQRT_2_OVER_PI * (h + 0.044715 * h ** 3)))
    return jnp.einsum("bth,hd->btd", g, w_proj) + b_proj


if __name__ == "__main__":
    # Small GPT-ish config: n_embd=128 -> hidden=512, batch=2, seq=256.
    batch, seq, n_embd = 2, 256, 128
    hidden = 4 * n_embd
    dtype = jnp.bfloat16  # MXU-native operand dtype; f32 accumulation inside

    key = jax.random.PRNGKey(0)
    kx, k1, k2, k3, k4 = jax.random.split(key, 5)

    x = jax.random.normal(kx, (batch, seq, n_embd), dtype=jnp.float32)
    w_fc = jax.random.normal(k1, (n_embd, hidden), dtype=jnp.float32) * 0.02
    b_fc = jax.random.normal(k2, (hidden,), dtype=jnp.float32) * 0.02
    w_proj = jax.random.normal(k3, (hidden, n_embd), dtype=jnp.float32) * 0.02
    b_proj = jax.random.normal(k4, (n_embd,), dtype=jnp.float32) * 0.02

    args_bf16 = [a.astype(dtype) for a in (x, w_fc, b_fc, w_proj, b_proj)]
    ref = mlp_reference(*[a.astype(jnp.float32) for a in args_bf16])

    # 1) Auto path (small weights -> fused, 1-D grid over rows).
    out_fused = jax.block_until_ready(mlp_pallas(*args_bf16))
    assert out_fused.shape == (batch, seq, n_embd)
    assert out_fused.dtype == dtype
    err_f = jnp.max(jnp.abs(out_fused.astype(jnp.float32) - ref))
    assert err_f < 2e-2, f"fused path max abs err {err_f}"

    # 2) Force the chunked/accumulator path (exercises the large-model route).
    out_chunk = jax.block_until_ready(
        mlp_pallas(*args_bf16, th=256, allow_fused=False))
    err_c = jnp.max(jnp.abs(out_chunk.astype(jnp.float32) - ref))
    assert err_c < 2e-2, f"chunked path max abs err {err_c}"

    print("KERNEL_OK")
</pallas_src>

<mosaic_0001>
module attributes {stable_mosaic.version = 11 : i64} {
  func.func @mlp_kernel_fused(%arg0: i32, %arg1: memref<256x128xbf16, #tpu.memory_space<vmem>>, %arg2: memref<128x512xbf16, #tpu.memory_space<vmem>>, %arg3: memref<1x512xbf16, #tpu.memory_space<vmem>>, %arg4: memref<512x128xbf16, #tpu.memory_space<vmem>>, %arg5: memref<1x128xbf16, #tpu.memory_space<vmem>>, %arg6: memref<256x128xbf16, #tpu.memory_space<vmem>>) attributes {dimension_semantics = [#tpu.dimension_semantics<parallel>], iteration_bounds = array<i64: 2>, scalar_prefetch = 0 : i64, scratch_operands = 0 : i64, tpu.core_type = #tpu.core_type<tc>, window_params = [{transform_indices = @transform_0, window_bounds = array<i64: 256, 128>}, {pipeline_mode = #tpu.pipeline_mode<synchronous>, transform_indices = @transform_1, window_bounds = array<i64: 128, 512>}, {pipeline_mode = #tpu.pipeline_mode<synchronous>, transform_indices = @transform_2, window_bounds = array<i64: 1, 512>}, {pipeline_mode = #tpu.pipeline_mode<synchronous>, transform_indices = @transform_3, window_bounds = array<i64: 512, 128>}, {pipeline_mode = #tpu.pipeline_mode<synchronous>, transform_indices = @transform_4, window_bounds = array<i64: 1, 128>}, {transform_indices = @transform_5, window_bounds = array<i64: 256, 128>}]} {
    %c0 = arith.constant 0 : index
    %c0_0 = arith.constant 0 : index
    %0 = vector.load %arg1[%c0, %c0_0] : memref<256x128xbf16, #tpu.memory_space<vmem>>, vector<256x128xbf16>
    %c0_1 = arith.constant 0 : index
    %c0_2 = arith.constant 0 : index
    %1 = vector.load %arg2[%c0_1, %c0_2] : memref<128x512xbf16, #tpu.memory_space<vmem>>, vector<128x512xbf16>
    %cst = arith.constant dense<0.000000e+00> : vector<256x512xf32>
    %2 = tpu.matmul %0, %1, %cst {dimension_numbers = #tpu.dot_dimension_numbers<[1], [0], [0], [1], [0, 0, 1, 1], [], []>} : vector<256x128xbf16>, vector<128x512xbf16>, vector<256x512xf32> -> vector<256x512xf32>
    %c0_3 = arith.constant 0 : index
    %c0_4 = arith.constant 0 : index
    %3 = vector.load %arg3[%c0_3, %c0_4] : memref<1x512xbf16, #tpu.memory_space<vmem>>, vector<1x512xbf16>
    %4 = arith.extf %3 : vector<1x512xbf16> to vector<1x512xf32>
    %5 = vector.broadcast %4 : vector<1x512xf32> to vector<256x512xf32>
    %6 = arith.addf %2, %5 : vector<256x512xf32>
    %cst_5 = arith.constant 0.0356774069 : f32
    %7 = vector.broadcast %cst_5 : f32 to vector<256x512xf32>
    %8 = arith.mulf %7, %6 : vector<256x512xf32>
    %9 = arith.mulf %8, %6 : vector<256x512xf32>
    %cst_6 = arith.constant 0.797884583 : f32
    %10 = vector.broadcast %cst_6 : f32 to vector<256x512xf32>
    %11 = arith.addf %10, %9 : vector<256x512xf32>
    %12 = arith.mulf %6, %11 : vector<256x512xf32>
    %cst_7 = arith.constant 5.000000e-01 : f32
    %13 = vector.broadcast %cst_7 : f32 to vector<256x512xf32>
    %14 = arith.mulf %13, %6 : vector<256x512xf32>
    %15 = math.tanh %12 : vector<256x512xf32>
    %cst_8 = arith.constant 1.000000e+00 : f32
    %16 = vector.broadcast %cst_8 : f32 to vector<256x512xf32>
    %17 = arith.addf %16, %15 : vector<256x512xf32>
    %18 = arith.mulf %14, %17 : vector<256x512xf32>
    %19 = arith.truncf %18 : vector<256x512xf32> to vector<256x512xbf16>
    %c0_9 = arith.constant 0 : index
    %c0_10 = arith.constant 0 : index
    %20 = vector.load %arg4[%c0_9, %c0_10] : memref<512x128xbf16, #tpu.memory_space<vmem>>, vector<512x128xbf16>
    %cst_11 = arith.constant dense<0.000000e+00> : vector<256x128xf32>
    %21 = tpu.matmul %19, %20, %cst_11 {dimension_numbers = #tpu.dot_dimension_numbers<[1], [0], [0], [1], [0, 0, 1, 1], [], []>} : vector<256x512xbf16>, vector<512x128xbf16>, vector<256x128xf32> -> vector<256x128xf32>
    %c0_12 = arith.constant 0 : index
    %c0_13 = arith.constant 0 : index
    %22 = vector.load %arg5[%c0_12, %c0_13] : memref<1x128xbf16, #tpu.memory_space<vmem>>, vector<1x128xbf16>
    %23 = arith.extf %22 : vector<1x128xbf16> to vector<1x128xf32>
    %24 = vector.broadcast %23 : vector<1x128xf32> to vector<256x128xf32>
    %25 = arith.addf %21, %24 : vector<256x128xf32>
    %26 = arith.truncf %25 : vector<256x128xf32> to vector<256x128xbf16>
    %c0_14 = arith.constant 0 : index
    %c0_15 = arith.constant 0 : index
    %27 = vector.load %arg6[%c0_14, %c0_15] : memref<256x128xbf16, #tpu.memory_space<vmem>>, vector<256x128xbf16>
    tpu.vector_store %arg6[%c0_14, %c0_15], %26 {strides = array<i32>} : memref<256x128xbf16, #tpu.memory_space<vmem>>, vector<256x128xbf16>,
    return
  }
  func.func @transform_0(%arg0: i32) -> (i32, i32) {
    %c0_i32 = arith.constant 0 : i32
    %c0_i32_0 = arith.constant 0 : i32
    return %arg0, %c0_i32 : i32, i32
  }
  func.func @transform_1(%arg0: i32) -> (i32, i32) {
    %c0_i32 = arith.constant 0 : i32
    %c0_i32_0 = arith.constant 0 : i32
    %c0_i32_1 = arith.constant 0 : i32
    return %c0_i32, %c0_i32_0 : i32, i32
  }
  func.func @transform_2(%arg0: i32) -> (i32, i32) {
    %c0_i32 = arith.constant 0 : i32
    %c0_i32_0 = arith.constant 0 : i32
    %c0_i32_1 = arith.constant 0 : i32
    return %c0_i32, %c0_i32_0 : i32, i32
  }
  func.func @transform_3(%arg0: i32) -> (i32, i32) {
    %c0_i32 = arith.constant 0 : i32
    %c0_i32_0 = arith.constant 0 : i32
    %c0_i32_1 = arith.constant 0 : i32
    return %c0_i32, %c0_i32_0 : i32, i32
  }
  func.func @transform_4(%arg0: i32) -> (i32, i32) {
    %c0_i32 = arith.constant 0 : i32
    %c0_i32_0 = arith.constant 0 : i32
    %c0_i32_1 = arith.constant 0 : i32
    return %c0_i32, %c0_i32_0 : i32, i32
  }
  func.func @transform_5(%arg0: i32) -> (i32, i32) {
    %c0_i32 = arith.constant 0 : i32
    %c0_i32_0 = arith.constant 0 : i32
    return %arg0, %c0_i32 : i32, i32
  }
}

</mosaic_0001>

<llo_original>
// kernel: tpu_custom_call.1
$region0: #{tpu_custom_call.1}
  #allocation0 [shape = 'u32[]', space=smem, size = 0x4, offset = 0x4, fixed_abs, tag = 'smem constant byte address 0x4 - core index']
  #allocation1 [shape = 'u32[144,128]{1,0:T(1,128)}', space=vmem, size = 0x12000, scoped, tag = 'internal scratch']
  %s0 = inlined_call_operand.hbm [shape: bf16[512,128], index: 0, kind: input, shape index: {}]
  %s1 = inlined_call_operand.hbm [shape: bf16[128,512], index: 1, kind: input, shape index: {}]
  %s2 = inlined_call_operand.vmem [shape: bf16[1,512], index: 2, kind: input, shape index: {}]
  %s3 = inlined_call_operand.hbm [shape: bf16[512,128], index: 3, kind: input, shape index: {}]
  %s4 = inlined_call_operand.vmem [shape: bf16[1,128], index: 4, kind: input, shape index: {}]
  %s5 = inlined_call_operand.hbm [shape: bf16[512,128], index: 5, kind: output, shape index: {}]
  %s6 = sld [smem:[#allocation0]]
  $region65: #{tpu_custom_call.1} parent=0
    _
  %s8 = ssub.s32 1, %s6
  %s9 = scalar_select 0, %s8, %s6
  $region1: #{tpu_custom_call.1} parent=0
    #allocation2 [shape = 'u8[131072]{0}', space=vmem, size = 0x20000, scoped, tag = 'input window, operand 0']
    #allocation3 [shape = 's32[2]{0}', space=sflag, size = 0x8, scoped, tag = 'scoped memory for tpu_custom_call.1']
    #allocation4 [shape = 's32[2]{0}', space=sflag, size = 0x8, scoped, tag = 'scoped memory for tpu_custom_call.1']
    #allocation5 [shape = 'u8[131072]{0}', space=vmem, size = 0x20000, scoped, tag = 'input window, operand 1, single buffered']
    #allocation6 [shape = 's32[1]{0}', space=sflag, size = 0x4, scoped, tag = 'scoped memory for tpu_custom_call.1']
    #allocation7 [shape = 'u8[131072]{0}', space=vmem, size = 0x20000, scoped, tag = 'input window, operand 3, single buffered']
    #allocation8 [shape = 'u8[131072]{0}', space=vmem, size = 0x20000, scoped, tag = 'output window, operand 0']
    %10 = vsyncpa [#allocation3], 0
    %s11 = scalar_lea.sflag [#allocation3], 1
    %12 = vsyncpa %s11, 0
    %13 = vsyncpa [#allocation6], 0
    %14 = vsyncpa [#allocation4], 0
    %s15 = scalar_lea.sflag [#allocation4], 1
    %16 = vsyncpa %s15, 0
    loop: start=0, step=1, limit=4
    $region2: #{tpu_custom_call.1} parent=1 // loop_pre_header
      _
    $region3: #{tpu_custom_call.1} parent=1 // loop_header
      %s18 = sphi 0, %s22
      %p19 = scmp.ge.s32.totalorder %s18, 4
      %s28 = sphi 0, %s30
      %s31 = sphi 0, %s28
      %s32 = sphi 0, %s31
      %s48 = sphi 0, %s32
      %s52 = sphi 0, %s52
      %s54 = sphi 0, %s52
      %s55 = sphi 0, %s54
      %s69 = sphi 0, %s55
      %s73 = sphi 0, %s73
      %s75 = sphi 0, %s73
      %s76 = sphi 0, %s75
      %s90 = sphi 0, %s76
      %s94 = sphi 0, %s94
      %s96 = sphi 0, %s94
      %s97 = sphi 0, %s96
      %s111 = sphi 0, %s97
      %s115 = sphi 0, %s115
      %s117 = sphi 0, %s115
      %s118 = sphi 0, %s117
      %s132 = sphi 0, %s118
      %s138 = sphi 0, %s140
      %s141 = sphi 0, %s138
      %s142 = sphi 0, %s141
      %s158 = sphi 0, %s142
    $region4: #{tpu_custom_call.1} parent=1 // loop_header_branch
      %21 = sbr.rel (%p19) target = $region8
    $region5: #{tpu_custom_call.1} parent=1 // loop_body
      %s23 = ssub.s32 %s18, 1
      %s24 = ssub.s32 %s18, 2
      %s25 = sadd.s32 %s18, 1
      %s26 = ssub.s32 %s18, %s25
      %p27 = scmp.eq.s32.totalorder %s26, 0
      %s29 = sadd.s32 %s28, 1
      %s30 = scalar_select %p27, %s28, %s29
      %p33 = pneg %p27
      %p34 = scmp.eq.s32.totalorder %s18, 1
      %p35 = por %p33, %p34
      %p36 = scmp.ne.s32.totalorder %s28, %s31
      %p37 = scmp.eq.s32.totalorder %s18, 0
      %p38 = por %p36, %p37
      %p39 = scmp.ne.s32.totalorder %s28, %s31
      %p40 = scmp.eq.s32.totalorder %s23, 1
      %p41 = por %p39, %p40
      %p42 = scmp.ne.s32.totalorder %s31, %s32
      %p43 = scmp.eq.s32.totalorder %s23, 0
      %p44 = por %p42, %p43
      %p45 = scmp.ne.s32.totalorder %s31, %s32
      %p46 = scmp.eq.s32.totalorder %s24, 1
      %p47 = por %p45, %p46
      %p49 = scmp.ne.s32.totalorder %s32, %s48
      %p50 = scmp.eq.s32.totalorder %s24, 0
      %p51 = por %p49, %p50
      %s53 = sadd.s32 %s52, 1
      %p56 = scmp.eq.s32.totalorder %s18, 1
      %p57 = scmp.ne.s32.totalorder %s52, %s54
      %p58 = scmp.eq.s32.totalorder %s18, 0
      %p59 = por %p57, %p58
      %p60 = scmp.ne.s32.totalorder %s52, %s54
      %p61 = scmp.eq.s32.totalorder %s23, 1
      %p62 = por %p60, %p61
      %p63 = scmp.ne.s32.totalorder %s54, %s55
      %p64 = scmp.eq.s32.totalorder %s23, 0
      %p65 = por %p63, %p64
      %p66 = scmp.ne.s32.totalorder %s54, %s55
      %p67 = scmp.eq.s32.totalorder %s24, 1
      %p68 = por %p66, %p67
      %p70 = scmp.ne.s32.totalorder %s55, %s69
      %p71 = scmp.eq.s32.totalorder %s24, 0
      %p72 = por %p70, %p71
      %s74 = sadd.s32 %s73, 1
      %p77 = scmp.eq.s32.totalorder %s18, 1
      %p78 = scmp.ne.s32.totalorder %s73, %s75
      %p79 = scmp.eq.s32.totalorder %s18, 0
      %p80 = por %p78, %p79
      %p81 = scmp.ne.s32.totalorder %s73, %s75
      %p82 = scmp.eq.s32.totalorder %s23, 1
      %p83 = por %p81, %p82
      %p84 = scmp.ne.s32.totalorder %s75, %s76
      %p85 = scmp.eq.s32.totalorder %s23, 0
      %p86 = por %p84, %p85
      %p87 = scmp.ne.s32.totalorder %s75, %s76
      %p88 = scmp.eq.s32.totalorder %s24, 1
      %p89 = por %p87, %p88
      %p91 = scmp.ne.s32.totalorder %s76, %s90
      %p92 = scmp.eq.s32.totalorder %s24, 0
      %p93 = por %p91, %p92
      %s95 = sadd.s32 %s94, 1
      %p98 = scmp.eq.s32.totalorder %s18, 1
      %p99 = scmp.ne.s32.totalorder %s94, %s96
      %p100 = scmp.eq.s32.totalorder %s18, 0
      %p101 = por %p99, %p100
      %p102 = scmp.ne.s32.totalorder %s94, %s96
      %p103 = scmp.eq.s32.totalorder %s23, 1
      %p104 = por %p102, %p103
      %p105 = scmp.ne.s32.totalorder %s96, %s97
      %p106 = scmp.eq.s32.totalorder %s23, 0
      %p107 = por %p105, %p106
      %p108 = scmp.ne.s32.totalorder %s96, %s97
      %p109 = scmp.eq.s32.totalorder %s24, 1
      %p110 = por %p108, %p109
      %p112 = scmp.ne.s32.totalorder %s97, %s111
      %p113 = scmp.eq.s32.totalorder %s24, 0
      %p114 = por %p112, %p113
      %s116 = sadd.s32 %s115, 1
      %p119 = scmp.eq.s32.totalorder %s18, 1
      %p120 = scmp.ne.s32.totalorder %s115, %s117
      %p121 = scmp.eq.s32.totalorder %s18, 0
      %p122 = por %p120, %p121
      %p123 = scmp.ne.s32.totalorder %s115, %s117
      %p124 = scmp.eq.s32.totalorder %s23, 1
      %p125 = por %p123, %p124
      %p126 = scmp.ne.s32.totalorder %s117, %s118
      %p127 = scmp.eq.s32.totalorder %s23, 0
      %p128 = por %p126, %p127
      %p129 = scmp.ne.s32.totalorder %s117, %s118
      %p130 = scmp.eq.s32.totalorder %s24, 1
      %p131 = por %p129, %p130
      %p133 = scmp.ne.s32.totalorder %s118, %s132
      %p134 = scmp.eq.s32.totalorder %s24, 0
      %p135 = por %p133, %p134
      %s136 = ssub.s32 %s18, %s25
      %p137 = scmp.eq.s32.totalorder %s136, 0
      %s139 = sadd.s32 %s138, 1
      %s140 = scalar_select %p137, %s138, %s139
      %p143 = pneg %p137
      %p144 = scmp.eq.s32.totalorder %s18, 1
      %p145 = por %p143, %p144
      %p146 = scmp.ne.s32.totalorder %s138, %s141
      %p147 = scmp.eq.s32.totalorder %s18, 0
      %p148 = por %p146, %p147
      %p149 = scmp.ne.s32.totalorder %s138, %s141
      %p150 = scmp.eq.s32.totalorder %s23, 1
      %p151 = por %p149, %p150
      %p152 = scmp.ne.s32.totalorder %s141, %s142
      %p153 = scmp.eq.s32.totalorder %s23, 0
      %p154 = por %p152, %p153
      %p155 = scmp.ne.s32.totalorder %s141, %s142
      %p156 = scmp.eq.s32.totalorder %s24, 1
      %p157 = por %p155, %p156
      %p159 = scmp.ne.s32.totalorder %s142, %s158
      %p160 = scmp.eq.s32.totalorder %s24, 0
      %p161 = por %p159, %p160
      %p162 = scmp.le.s32.totalorder 1, %s18
      %p163 = scmp.lt.s32.totalorder %s18, 3
      %p164 = pnand %p162, %p163
      %p165 = pneg %p164
      // Predicated region
      $region9: #{tpu_custom_call.1} parent=5 // pred_check
        _
      $region10: #{tpu_custom_call.1} parent=5 // pred_check_branch
        %167 = sbr.rel (%p164) target = $region12
      $region11: #{tpu_custom_call.1} parent=5 // pred_region
        %s168 = ssub.s32 %s18, 1
        // Predicated region
        $region13: #{tpu_custom_call.1} parent=11 // pred_check
          %p169 = pneg %p65
        $region14: #{tpu_custom_call.1} parent=11 // pred_check_branch
          %171 = sbr.rel (%p169) target = $region16
        $region15: #{tpu_custom_call.1} parent=11 // pred_region
          %s173 = ssub.s32 4096, 4096
          %174 = vsyncadd [#allocation6], %s173
          %s175 = sshll.u32 [#allocation5], 4
          %s176 = int_to_ptr.vmem [resolvable:$true] %s175
          %181 = dma.hbm_to_vmem [thread:$0]  %s1, 4096, %s176, [#allocation6], 256, 256, 16
        $region16: #{tpu_custom_call.1} parent=11 // pred_fallthru
          _
        // Predicated region
        $region17: #{tpu_custom_call.1} parent=11 // pred_check
          %p182 = pneg %p86
        $region18: #{tpu_custom_call.1} parent=11 // pred_check_branch
          %184 = sbr.rel (%p182) target = $region20
        $region19: #{tpu_custom_call.1} parent=11 // pred_region
          _
        $region20: #{tpu_custom_call.1} parent=11 // pred_fallthru
          _
        // Predicated region
        $region21: #{tpu_custom_call.1} parent=11 // pred_check
          %p185 = pneg %p107
        $region22: #{tpu_custom_call.1} parent=11 // pred_check_branch
          %187 = sbr.rel (%p185) target = $region24
        $region23: #{tpu_custom_call.1} parent=11 // pred_region
          %s189 = ssub.s32 4096, 4096
          %190 = vsyncadd [#allocation6], %s189
          %s191 = sshll.u32 [#allocation7], 4
          %s192 = int_to_ptr.vmem [resolvable:$true] %s191
          %197 = dma.hbm_to_vmem [thread:$0]  %s3, 4096, %s192, [#allocation6], 64, 64, 4
        $region24: #{tpu_custom_call.1} parent=11 // pred_fallthru
          _
        // Predicated region
        $region25: #{tpu_custom_call.1} parent=11 // pred_check
          %p198 = pneg %p128
        $region26: #{tpu_custom_call.1} parent=11 // pred_check_branch
          %200 = sbr.rel (%p198) target = $region28
        $region27: #{tpu_custom_call.1} parent=11 // pred_region
          _
        $region28: #{tpu_custom_call.1} parent=11 // pred_fallthru
          _
      $region12: #{tpu_custom_call.1} parent=5 // pred_fallthru
        _
      %p201 = scmp.lt.s32.totalorder %s18, 2
      // Predicated region
      $region29: #{tpu_custom_call.1} parent=5 // pred_check
        %p202 = pneg %p201
      $region30: #{tpu_custom_call.1} parent=5 // pred_check_branch
        %204 = sbr.rel (%p202) target = $region32
      $region31: #{tpu_custom_call.1} parent=5 // pred_region
        // Predicated region
        $region33: #{tpu_custom_call.1} parent=31 // pred_check
          %p205 = pneg %p38
        $region34: #{tpu_custom_call.1} parent=31 // pred_check_branch
          %207 = sbr.rel (%p205) target = $region36
        $region35: #{tpu_custom_call.1} parent=31 // pred_region
          %s208 = sand.u32 %s28, 1
          %s209 = scalar_lea.sflag [#allocation3], %s208
          %s210 = sand.u32 %s28, 1
          %s211 = smul.addr %s210, 128
          %s212 = scalar_lea.vmem [#allocation2], %s211
          %s213 = smul.u32 32, %s18
          %s215 = ssub.s32 2048, 2048
          %216 = vsyncadd %s209, %s215
          %s217 = smul.addr %s213, 64
          %s218 = scalar_lea.hbm %s0, %s217
          %s219 = sshll.u32 %s212, 4
          %s220 = int_to_ptr.vmem [resolvable:$true] %s219
          %225 = dma.hbm_to_vmem [thread:$0]  %s218, 2048, %s220, %s209, 64, 64, 4
        $region36: #{tpu_custom_call.1} parent=31 // pred_fallthru
          _
      $region32: #{tpu_custom_call.1} parent=5 // pred_fallthru
        _
      %p226 = scmp.le.s32.totalorder 1, %s18
      %p227 = scmp.lt.s32.totalorder %s18, 3
      %p228 = pnand %p226, %p227
      %p229 = pneg %p228
      // Predicated region
      $region37: #{tpu_custom_call.1} parent=5 // pred_check
        _
      $region38: #{tpu_custom_call.1} parent=5 // pred_check_branch
        %231 = sbr.rel (%p228) target = $region40
      $region39: #{tpu_custom_call.1} parent=5 // pred_region
        %s232 = ssub.s32 %s18, 1
        %s233 = sand.u32 %s31, 1
        %s234 = scalar_lea.sflag [#allocation3], %s233
        %s235 = sand.u32 %s31, 1
        %s236 = smul.addr %s235, 128
        %s237 = scalar_lea.vmem [#allocation2], %s236
        // Predicated region
        $region41: #{tpu_custom_call.1} parent=39 // pred_check
          %p238 = pneg %p44
        $region42: #{tpu_custom_call.1} parent=39 // pred_check_branch
          %240 = sbr.rel (%p238) target = $region44
        $region43: #{tpu_custom_call.1} parent=39 // pred_region
          %241 = dma.done %s234, 2048
        $region44: #{tpu_custom_call.1} parent=39 // pred_fallthru
          _
        // Predicated region
        $region45: #{tpu_custom_call.1} parent=39 // pred_check
          %p242 = pneg %p65
        $region46: #{tpu_custom_call.1} parent=39 // pred_check_branch
          %244 = sbr.rel (%p242) target = $region48
        $region47: #{tpu_custom_call.1} parent=39 // pred_region
          %245 = dma.done [#allocation6], 4096
        $region48: #{tpu_custom_call.1} parent=39 // pred_fallthru
          _
        // Predicated region
        $region49: #{tpu_custom_call.1} parent=39 // pred_check
          %p246 = pneg %p107
        $region50: #{tpu_custom_call.1} parent=39 // pred_check_branch
          %248 = sbr.rel (%p246) target = $region52
        $region51: #{tpu_custom_call.1} parent=39 // pred_region
          %249 = dma.done [#allocation6], 4096
        $region52: #{tpu_custom_call.1} parent=39 // pred_fallthru
          _
        %s250 = sand.u32 %s31, 1
        %s251 = scalar_lea.sflag [#allocation3], %s250
        %s252 = sand.u32 %s31, 1
        %s253 = smul.addr %s252, 128
        %s254 = scalar_lea.vmem [#allocation2], %s253
        %p255 = pneg %p44
        %p256 = pneg %p41
        %p257 = pneg %p65
        %p258 = pneg %p62
        %p259 = pneg %p86
        %p260 = pneg %p83
        %p261 = pneg %p107
        %p262 = pneg %p104
        %p263 = pneg %p128
        %p264 = pneg %p125
        %p265 = pneg %p154
        %p266 = pneg %p151
        %s267 = sand.u32 %s141, 1
        %s268 = scalar_lea.sflag [#allocation4], %s267
        %s269 = sand.u32 %s141, 1
        %s270 = smul.addr %s269, 128
        %s271 = scalar_lea.vmem [#allocation8], %s270
        %s272 = smul.u32 32, %s23
        %s273 = smul.u32 32, %s23
        %v275 = vld [vmem:[%s237] sm:$0xf]
        %v276 = vld [vmem:[%s237 + $0x4] sm:$0xf]
        %v277 = vld [vmem:[%s237 + $0x8] sm:$0xf]
        %v278 = vld [vmem:[%s237 + $0xc] sm:$0xf]
        %v279 = vld [vmem:[%s237 + $0x10] sm:$0xf]
        %v280 = vld [vmem:[%s237 + $0x14] sm:$0xf]
        %v281 = vld [vmem:[%s237 + $0x18] sm:$0xf]
        %v282 = vld [vmem:[%s237 + $0x1c] sm:$0xf]
        %v283 = vld [vmem:[%s237 + $0x20] sm:$0xf]
        %v284 = vld [vmem:[%s237 + $0x24] sm:$0xf]
        %v285 = vld [vmem:[%s237 + $0x28] sm:$0xf]
        %v286 = vld [vmem:[%s237 + $0x2c] sm:$0xf]
        %v287 = vld [vmem:[%s237 + $0x30] sm:$0xf]
        %v288 = vld [vmem:[%s237 + $0x34] sm:$0xf]
        %v289 = vld [vmem:[%s237 + $0x38] sm:$0xf]
        %v290 = vld [vmem:[%s237 + $0x3c] sm:$0xf]
        %v291 = vld [vmem:[%s237 + $0x40] sm:$0xf]
        %v292 = vld [vmem:[%s237 + $0x44] sm:$0xf]
        %v293 = vld [vmem:[%s237 + $0x48] sm:$0xf]
        %v294 = vld [vmem:[%s237 + $0x4c] sm:$0xf]
        %v295 = vld [vmem:[%s237 + $0x50] sm:$0xf]
        %v296 = vld [vmem:[%s237 + $0x54] sm:$0xf]
        %v297 = vld [vmem:[%s237 + $0x58] sm:$0xf]
        %v298 = vld [vmem:[%s237 + $0x5c] sm:$0xf]
        %v299 = vld [vmem:[%s237 + $0x60] sm:$0xf]
        %v300 = vld [vmem:[%s237 + $0x64] sm:$0xf]
        %v301 = vld [vmem:[%s237 + $0x68] sm:$0xf]
        %v302 = vld [vmem:[%s237 + $0x6c] sm:$0xf]
        %v303 = vld [vmem:[%s237 + $0x70] sm:$0xf]
        %v304 = vld [vmem:[%s237 + $0x74] sm:$0xf]
        %v305 = vld [vmem:[%s237 + $0x78] sm:$0xf]
        %v306 = vld [vmem:[%s237 + $0x7c] sm:$0xf]
        %v307 = vld [vmem:[#allocation5] sm:$0xff]
        %v308 = vld [vmem:[#allocation5 + $0x8] sm:$0xff]
        %v309 = vld [vmem:[#allocation5 + $0x10] sm:$0xff]
        %v310 = vld [vmem:[#allocation5 + $0x18] sm:$0xff]
        %v311 = vld [vmem:[#allocation5 + $0x20] sm:$0xff]
        %v312 = vld [vmem:[#allocation5 + $0x28] sm:$0xff]
        %v313 = vld [vmem:[#allocation5 + $0x30] sm:$0xff]
        %v314 = vld [vmem:[#allocation5 + $0x38] sm:$0xff]
        %v315 = vld [vmem:[#allocation5 + $0x40] sm:$0xff]
        %v316 = vld [vmem:[#allocation5 + $0x48] sm:$0xff]
        %v317 = vld [vmem:[#allocation5 + $0x50] sm:$0xff]
        %v318 = vld [vmem:[#allocation5 + $0x58] sm:$0xff]
        %v319 = vld [vmem:[#allocation5 + $0x60] sm:$0xff]
        %v320 = vld [vmem:[#allocation5 + $0x68] sm:$0xff]
        %v321 = vld [vmem:[#allocation5 + $0x70] sm:$0xff]
        %v322 = vld [vmem:[#allocation5 + $0x78] sm:$0xff]
        %v323 = vld [vmem:[#allocation5 + $0x80] sm:$0xff]
        %v324 = vld [vmem:[#allocation5 + $0x88] sm:$0xff]
        %v325 = vld [vmem:[#allocation5 + $0x90] sm:$0xff]
        %v326 = vld [vmem:[#allocation5 + $0x98] sm:$0xff]
        %v327 = vld [vmem:[#allocation5 + $0xa0] sm:$0xff]
        %v328 = vld [vmem:[#allocation5 + $0xa8] sm:$0xff]
        %v329 = vld [vmem:[#allocation5 + $0xb0] sm:$0xff]
        %v330 = vld [vmem:[#allocation5 + $0xb8] sm:$0xff]
        %v331 = vld [vmem:[#allocation5 + $0xc0] sm:$0xff]
        %v332 = vld [vmem:[#allocation5 + $0xc8] sm:$0xff]
        %v333 = vld [vmem:[#allocation5 + $0xd0] sm:$0xff]
        %v334 = vld [vmem:[#allocation5 + $0xd8] sm:$0xff]
        %v335 = vld [vmem:[#allocation5 + $0xe0] sm:$0xff]
        %v336 = vld [vmem:[#allocation5 + $0xe8] sm:$0xff]
        %v337 = vld [vmem:[#allocation5 + $0xf0] sm:$0xff]
        %v338 = vld [vmem:[#allocation5 + $0xf8] sm:$0xff]
        %v339 = vld [vmem:[%s2] sm:$0xf]
        %v340 = vunpack.c.l.bf16 %v339
        %v342 = vlaneseq
        %v343 = vshrl.u32 %v342, 7
        %v344 = vsub.s32 0, %v343
        %v345 = vrot.slane %v340, %v344
        %v346 = vlaneseq
        %v347 = vshrl.u32 %v346, 7
        %v348 = vsub.s32 2, %v347
        %v349 = vrot.slane %v340, %v348
        %v350 = vlaneseq
        %v351 = vshrl.u32 %v350, 7
        %v352 = vsub.s32 4, %v351
        %v353 = vrot.slane %v340, %v352
        %v354 = vlaneseq
        %v355 = vshrl.u32 %v354, 7
        %v356 = vsub.s32 6, %v355
        %v357 = vrot.slane %v340, %v356
        %v362 = vlaneseq
        %v363 = vshrl.u32 %v362, 7
        %v364 = vsub.s32 0, %v363
        %v365 = vrot.slane %v345, %v364
        %v366 = vlaneseq
        %v367 = vshrl.u32 %v366, 7
        %v368 = vsub.s32 0, %v367
        %v369 = vrot.slane %v349, %v368
        %v370 = vlaneseq
        %v371 = vshrl.u32 %v370, 7
        %v372 = vsub.s32 0, %v371
        %v373 = vrot.slane %v353, %v372
        %v374 = vlaneseq
        %v375 = vshrl.u32 %v374, 7
        %v376 = vsub.s32 0, %v375
        %v377 = vrot.slane %v357, %v376
        %v410 = vunpack.c.l.b16 %v275
        %v411 = vunpack.c.l.b16 %v276
        %v412 = vunpack.c.l.b16 %v277
        %v413 = vunpack.c.l.b16 %v278
        %v414 = vunpack.c.l.b16 %v279
        %v415 = vunpack.c.l.b16 %v280
        %v416 = vunpack.c.l.b16 %v281
        %v417 = vunpack.c.l.b16 %v282
        %v418 = vunpack.c.l.b16 %v283
        %v419 = vunpack.c.l.b16 %v284
        %v420 = vunpack.c.l.b16 %v285
        %v421 = vunpack.c.l.b16 %v286
        %v422 = vunpack.c.l.b16 %v287
        %v423 = vunpack.c.l.b16 %v288
        %v424 = vunpack.c.l.b16 %v289
        %v425 = vunpack.c.l.b16 %v290
        %v426 = vunpack.c.l.b16 %v291
        %v427 = vunpack.c.l.b16 %v292
        %v428 = vunpack.c.l.b16 %v293
        %v429 = vunpack.c.l.b16 %v294
        %v430 = vunpack.c.l.b16 %v295
        %v431 = vunpack.c.l.b16 %v296
        %v432 = vunpack.c.l.b16 %v297
        %v433 = vunpack.c.l.b16 %v298
        %v434 = vunpack.c.l.b16 %v299
        %v435 = vunpack.c.l.b16 %v300
        %v436 = vunpack.c.l.b16 %v301
        %v437 = vunpack.c.l.b16 %v302
        %v438 = vunpack.c.l.b16 %v303
        %v439 = vunpack.c.l.b16 %v304
        %v440 = vunpack.c.l.b16 %v305
        %v441 = vunpack.c.l.b16 %v306
        %v442 = vpack.c.b16 %v411, %v410
        %v443 = vpack.c.b16 %v413, %v412
        %v444 = vpack.c.b16 %v415, %v414
        %v445 = vpack.c.b16 %v417, %v416
        %v446 = vpack.c.b16 %v419, %v418
        %v447 = vpack.c.b16 %v421, %v420
        %v448 = vpack.c.b16 %v423, %v422
        %v449 = vpack.c.b16 %v425, %v424
        %v450 = vpack.c.b16 %v427, %v426
        %v451 = vpack.c.b16 %v429, %v428
        %v452 = vpack.c.b16 %v431, %v430
        %v453 = vpack.c.b16 %v433, %v432
        %v454 = vpack.c.b16 %v435, %v434
        %v455 = vpack.c.b16 %v437, %v436
        %v456 = vpack.c.b16 %v439, %v438
        %v457 = vpack.c.b16 %v441, %v440
        %v506 = vunpack.c.l.b16 %v307
        %v507 = vunpack.c.h.b16 %v307
        %v508 = vunpack.c.l.b16 %v308
        %v509 = vunpack.c.h.b16 %v308
        %v510 = vunpack.c.l.b16 %v309
        %v511 = vunpack.c.h.b16 %v309
        %v512 = vunpack.c.l.b16 %v310
        %v513 = vunpack.c.h.b16 %v310
        %v514 = vunpack.c.l.b16 %v311
        %v515 = vunpack.c.h.b16 %v311
        %v516 = vunpack.c.l.b16 %v312
        %v517 = vunpack.c.h.b16 %v312
        %v518 = vunpack.c.l.b16 %v313
        %v519 = vunpack.c.h.b16 %v313
        %v520 = vunpack.c.l.b16 %v314
        %v521 = vunpack.c.h.b16 %v314
        %v522 = vunpack.c.l.b16 %v315
        %v523 = vunpack.c.h.b16 %v315
        %v524 = vunpack.c.l.b16 %v316
        %v525 = vunpack.c.h.b16 %v316
        %v526 = vunpack.c.l.b16 %v317
        %v527 = vunpack.c.h.b16 %v317
        %v528 = vunpack.c.l.b16 %v318
        %v529 = vunpack.c.h.b16 %v318
        %v530 = vunpack.c.l.b16 %v319
        %v531 = vunpack.c.h.b16 %v319
        %v532 = vunpack.c.l.b16 %v320
        %v533 = vunpack.c.h.b16 %v320
        %v534 = vunpack.c.l.b16 %v321
        %v535 = vunpack.c.h.b16 %v321
        %v536 = vunpack.c.l.b16 %v322
        %v537 = vunpack.c.h.b16 %v322
        %v538 = vunpack.c.l.b16 %v323
        %v539 = vunpack.c.h.b16 %v323
        %v540 = vunpack.c.l.b16 %v324
        %v541 = vunpack.c.h.b16 %v324
        %v542 = vunpack.c.l.b16 %v325
        %v543 = vunpack.c.h.b16 %v325
        %v544 = vunpack.c.l.b16 %v326
        %v545 = vunpack.c.h.b16 %v326
        %v546 = vunpack.c.l.b16 %v327
        %v547 = vunpack.c.h.b16 %v327
        %v548 = vunpack.c.l.b16 %v328
        %v549 = vunpack.c.h.b16 %v328
        %v550 = vunpack.c.l.b16 %v329
        %v551 = vunpack.c.h.b16 %v329
        %v552 = vunpack.c.l.b16 %v330
        %v553 = vunpack.c.h.b16 %v330
        %v554 = vunpack.c.l.b16 %v331
        %v555 = vunpack.c.h.b16 %v331
        %v556 = vunpack.c.l.b16 %v332
        %v557 = vunpack.c.h.b16 %v332
        %v558 = vunpack.c.l.b16 %v333
        %v559 = vunpack.c.h.b16 %v333
        %v560 = vunpack.c.l.b16 %v334
        %v561 = vunpack.c.h.b16 %v334
        %v562 = vunpack.c.l.b16 %v335
        %v563 = vunpack.c.h.b16 %v335
        %v564 = vunpack.c.l.b16 %v336
        %v565 = vunpack.c.h.b16 %v336
        %v566 = vunpack.c.l.b16 %v337
        %v567 = vunpack.c.h.b16 %v337
        %v568 = vunpack.c.l.b16 %v338
        %v569 = vunpack.c.h.b16 %v338
        %v570 = vpack.c.b16 %v510, %v506
        %v571 = vpack.c.b16 %v511, %v507
        %v572 = vpack.c.b16 %v512, %v508
        %v573 = vpack.c.b16 %v513, %v509
        %v574 = vpack.c.b16 %v518, %v514
        %v575 = vpack.c.b16 %v519, %v515
        %v576 = vpack.c.b16 %v520, %v516
        %v577 = vpack.c.b16 %v521, %v517
        %v578 = vpack.c.b16 %v526, %v522
        %v579 = vpack.c.b16 %v527, %v523
        %v580 = vpack.c.b16 %v528, %v524
        %v581 = vpack.c.b16 %v529, %v525
        %v582 = vpack.c.b16 %v534, %v530
        %v583 = vpack.c.b16 %v535, %v531
        %v584 = vpack.c.b16 %v536, %v532
        %v585 = vpack.c.b16 %v537, %v533
        %v586 = vpack.c.b16 %v542, %v538
        %v587 = vpack.c.b16 %v543, %v539
        %v588 = vpack.c.b16 %v544, %v540
        %v589 = vpack.c.b16 %v545, %v541
        %v590 = vpack.c.b16 %v550, %v546
        %v591 = vpack.c.b16 %v551, %v547
        %v592 = vpack.c.b16 %v552, %v548
        %v593 = vpack.c.b16 %v553, %v549
        %v594 = vpack.c.b16 %v558, %v554
        %v595 = vpack.c.b16 %v559, %v555
        %v596 = vpack.c.b16 %v560, %v556
        %v597 = vpack.c.b16 %v561, %v557
        %v598 = vpack.c.b16 %v566, %v562
        %v599 = vpack.c.b16 %v567, %v563
        %v600 = vpack.c.b16 %v568, %v564
        %v601 = vpack.c.b16 %v569, %v565
        %634 = vmatprep.subr.bf16.mxu0 %v571
        %635 = vmatpush1.bf16.msra.mxu0 %v570
        %636 = vmatprep.subr.bf16.mxu0 %v575
        %637 = vmatpush1.bf16.msra.mxu0 %v574
        %638 = vmatprep.subr.bf16.mxu0 %v579
        %639 = vmatpush1.bf16.msra.mxu0 %v578
        %640 = vmatprep.subr.bf16.mxu0 %v583
        %641 = vmatpush1.bf16.msra.mxu0 %v582
        %642 = vmatprep.subr.bf16.mxu0 %v587
        %643 = vmatpush1.bf16.msra.mxu0 %v586
        %644 = vmatprep.subr.bf16.mxu0 %v591
        %645 = vmatpush1.bf16.msra.mxu0 %v590
        %646 = vmatprep.subr.bf16.mxu0 %v595
        %647 = vmatpush1.bf16.msra.mxu0 %v594
        %648 = vmatprep.subr.bf16.mxu0 %v599
        %649 = vmatpush1.bf16.msra.mxu0 %v598
        %650 = vmatprep.subr.bf16.mxu0 0
        %651 = vmatpush1.bf16.msra.mxu0 0
        %652 = vmatprep.subr.bf16.mxu0 0
        %653 = vmatpush1.bf16.msra.mxu0 0
        %654 = vmatprep.subr.bf16.mxu0 0
        %655 = vmatpush1.bf16.msra.mxu0 0
        %656 = vmatprep.subr.bf16.mxu0 0
        %657 = vmatpush1.bf16.msra.mxu0 0
        %658 = vmatprep.subr.bf16.mxu0 0
        %659 = vmatpush1.bf16.msra.mxu0 0
        %660 = vmatprep.subr.bf16.mxu0 0
        %661 = vmatpush1.bf16.msra.mxu0 0
        %662 = vmatprep.subr.bf16.mxu0 0
        %663 = vmatpush1.bf16.msra.mxu0 0
        %664 = vmatprep.subr.bf16.mxu0 0
        %665 = vmatpush1.bf16.msra.mxu0 0
        %666 = vmatprep.mubr.bf16.mxu0 0
        %667 = vmatmul.mubr.bf16.gmra.mrb[0].mxu0 %v442
        %v668 = vpop.f32.mrb[0].mxu0
        %v669 = vadd.f32 %v365, %v668
        %v670 = vpop.f32.mrb[0].mxu0
        %v671 = vadd.f32 %v369, %v670
        %v672 = vpop.f32.mrb[0].mxu0
        %v673 = vadd.f32 %v365, %v672
        %v674 = vpop.f32.mrb[0].mxu0
        %v675 = vadd.f32 %v369, %v674
        %676 = vmatprep.mubr.bf16.mxu0 0
        %677 = vmatmul.mubr.bf16.gmra.mrb[0].mxu0 %v443
        %v678 = vpop.f32.mrb[0].mxu0
        %v679 = vadd.f32 %v365, %v678
        %v680 = vpop.f32.mrb[0].mxu0
        %v681 = vadd.f32 %v369, %v680
        %v682 = vpop.f32.mrb[0].mxu0
        %v683 = vadd.f32 %v365, %v682
        %v684 = vpop.f32.mrb[0].mxu0
        %v685 = vadd.f32 %v369, %v684
        %686 = vmatprep.mubr.bf16.mxu0 0
        %687 = vmatmul.mubr.bf16.gmra.mrb[0].mxu0 %v444
        %v688 = vpop.f32.mrb[0].mxu0
        %v689 = vadd.f32 %v365, %v688
        %v690 = vpop.f32.mrb[0].mxu0
        %v691 = vadd.f32 %v369, %v690
        %v692 = vpop.f32.mrb[0].mxu0
        %v693 = vadd.f32 %v365, %v692
        %v694 = vpop.f32.mrb[0].mxu0
        %v695 = vadd.f32 %v369, %v694
        %696 = vmatprep.mubr.bf16.mxu0 0
        %697 = vmatmul.mubr.bf16.gmra.mrb[0].mxu0 %v445
        %v698 = vpop.f32.mrb[0].mxu0
        %v699 = vadd.f32 %v365, %v698
        %v700 = vpop.f32.mrb[0].mxu0
        %v701 = vadd.f32 %v369, %v700
        %v702 = vpop.f32.mrb[0].mxu0
        %v703 = vadd.f32 %v365, %v702
        %v704 = vpop.f32.mrb[0].mxu0
        %v705 = vadd.f32 %v369, %v704
        %706 = vmatprep.mubr.bf16.mxu0 0
        %707 = vmatmul.mubr.bf16.gmra.mrb[0].mxu0 %v446
        %v708 = vpop.f32.mrb[0].mxu0
        %v709 = vadd.f32 %v365, %v708
        %v710 = vpop.f32.mrb[0].mxu0
        %v711 = vadd.f32 %v369, %v710
        %v712 = vpop.f32.mrb[0].mxu0
        %v713 = vadd.f32 %v365, %v712
        %v714 = vpop.f32.mrb[0].mxu0
        %v715 = vadd.f32 %v369, %v714
        %716 = vmatprep.mubr.bf16.mxu0 0
        %717 = vmatmul.mubr.bf16.gmra.mrb[0].mxu0 %v447
        %v718 = vpop.f32.mrb[0].mxu0
        %v719 = vadd.f32 %v365, %v718
        %v720 = vpop.f32.mrb[0].mxu0
        %v721 = vadd.f32 %v369, %v720
        %v722 = vpop.f32.mrb[0].mxu0
        %v723 = vadd.f32 %v365, %v722
        %v724 = vpop.f32.mrb[0].mxu0
        %v725 = vadd.f32 %v369, %v724
        %726 = vmatprep.mubr.bf16.mxu0 0
        %727 = vmatmul.mubr.bf16.gmra.mrb[0].mxu0 %v448
        %v728 = vpop.f32.mrb[0].mxu0
        %v729 = vadd.f32 %v365, %v728
        %v730 = vpop.f32.mrb[0].mxu0
        %v731 = vadd.f32 %v369, %v730
        %v732 = vpop.f32.mrb[0].mxu0
        %v733 = vadd.f32 %v365, %v732
        %v734 = vpop.f32.mrb[0].mxu0
        %v735 = vadd.f32 %v369, %v734
        %736 = vmatprep.mubr.bf16.mxu0 0
        %737 = vmatmul.mubr.bf16.gmra.mrb[0].mxu0 %v449
        %v738 = vpop.f32.mrb[0].mxu0
        %v739 = vadd.f32 %v365, %v738
        %v740 = vpop.f32.mrb[0].mxu0
        %v741 = vadd.f32 %v369, %v740
        %v742 = vpop.f32.mrb[0].mxu0
        %v743 = vadd.f32 %v365, %v742
        %v744 = vpop.f32.mrb[0].mxu0
        %v745 = vadd.f32 %v369, %v744
        %746 = vmatprep.mubr.bf16.mxu0 0
        %747 = vmatmul.mubr.bf16.gmra.mrb[0].mxu0 %v450
        %v748 = vpop.f32.mrb[0].mxu0
        %v749 = vadd.f32 %v365, %v748
        %v750 = vpop.f32.mrb[0].mxu0
        %v751 = vadd.f32 %v369, %v750
        %v752 = vpop.f32.mrb[0].mxu0
        %v753 = vadd.f32 %v365, %v752
        %v754 = vpop.f32.mrb[0].mxu0
        %v755 = vadd.f32 %v369, %v754
        %756 = vmatprep.mubr.bf16.mxu0 0
        %757 = vmatmul.mubr.bf16.gmra.mrb[0].mxu0 %v451
        %v758 = vpop.f32.mrb[0].mxu0
        %v759 = vadd.f32 %v365, %v758
        %v760 = vpop.f32.mrb[0].mxu0
        %v761 = vadd.f32 %v369, %v760
        %v762 = vpop.f32.mrb[0].mxu0
        %v763 = vadd.f32 %v365, %v762
        %v764 = vpop.f32.mrb[0].mxu0
        %v765 = vadd.f32 %v369, %v764
        %766 = vmatprep.mubr.bf16.mxu0 0
        %767 = vmatmul.mubr.bf16.gmra.mrb[0].mxu0 %v452
        %v768 = vpop.f32.mrb[0].mxu0
        %v769 = vadd.f32 %v365, %v768
        %v770 = vpop.f32.mrb[0].mxu0
        %v771 = vadd.f32 %v369, %v770
        %v772 = vpop.f32.mrb[0].mxu0
        %v773 = vadd.f32 %v365, %v772
        %v774 = vpop.f32.mrb[0].mxu0
        %v775 = vadd.f32 %v369, %v774
        %776 = vmatprep.mubr.bf16.mxu0 0
        %777 = vmatmul.mubr.bf16.gmra.mrb[0].mxu0 %v453
        %v778 = vpop.f32.mrb[0].mxu0
        %v779 = vadd.f32 %v365, %v778
        %v780 = vpop.f32.mrb[0].mxu0
        %v781 = vadd.f32 %v369, %v780
        %v782 = vpop.f32.mrb[0].mxu0
        %v783 = vadd.f32 %v365, %v782
        %v784 = vpop.f32.mrb[0].mxu0
        %v785 = vadd.f32 %v369, %v784
        %786 = vmatprep.mubr.bf16.mxu0 0
        %787 = vmatmul.mubr.bf16.gmra.mrb[0].mxu0 %v454
        %v788 = vpop.f32.mrb[0].mxu0
        %v789 = vadd.f32 %v365, %v788
        %v790 = vpop.f32.mrb[0].mxu0
        %v791 = vadd.f32 %v369, %v790
        %v792 = vpop.f32.mrb[0].mxu0
        %v793 = vadd.f32 %v365, %v792
        %v794 = vpop.f32.mrb[0].mxu0
        %v795 = vadd.f32 %v369, %v794
        %796 = vmatprep.mubr.bf16.mxu0 0
        %797 = vmatmul.mubr.bf16.gmra.mrb[0].mxu0 %v455
        %v798 = vpop.f32.mrb[0].mxu0
        %v799 = vadd.f32 %v365, %v798
        %v800 = vpop.f32.mrb[0].mxu0
        %v801 = vadd.f32 %v369, %v800
        %v802 = vpop.f32.mrb[0].mxu0
        %v803 = vadd.f32 %v365, %v802
        %v804 = vpop.f32.mrb[0].mxu0
        %v805 = vadd.f32 %v369, %v804
        %806 = vmatprep.mubr.bf16.mxu0 0
        %807 = vmatmul.mubr.bf16.gmra.mrb[0].mxu0 %v456
        %v808 = vpop.f32.mrb[0].mxu0
        %v809 = vadd.f32 %v365, %v808
        %v810 = vpop.f32.mrb[0].mxu0
        %v811 = vadd.f32 %v369, %v810
        %v812 = vpop.f32.mrb[0].mxu0
        %v813 = vadd.f32 %v365, %v812
        %v814 = vpop.f32.mrb[0].mxu0
        %v815 = vadd.f32 %v369, %v814
        %816 = vmatprep.mubr.bf16.mxu0 0
        %817 = vmatmul.mubr.bf16.gmra.mrb[0].mxu0 %v457
        %v818 = vpop.f32.mrb[0].mxu0
        %v819 = vadd.f32 %v365, %v818
        %v820 = vpop.f32.mrb[0].mxu0
        %v821 = vadd.f32 %v369, %v820
        %v822 = vpop.f32.mrb[0].mxu0
        %v823 = vadd.f32 %v365, %v822
        %v824 = vpop.f32.mrb[0].mxu0
        %v825 = vadd.f32 %v369, %v824
        %826 = vdwg.mxu0
        %827 = vmatprep.subr.bf16.mxu0 %v573
        %828 = vmatpush1.bf16.msra.mxu0 %v572
        %829 = vmatprep.subr.bf16.mxu0 %v577
        %830 = vmatpush1.bf16.msra.mxu0 %v576
        %831 = vmatprep.subr.bf16.mxu0 %v581
        %832 = vmatpush1.bf16.msra.mxu0 %v580
        %833 = vmatprep.subr.bf16.mxu0 %v585
        %834 = vmatpush1.bf16.msra.mxu0 %v584
        %835 = vmatprep.subr.bf16.mxu0 %v589
        %836 = vmatpush1.bf16.msra.mxu0 %v588
        %837 = vmatprep.subr.bf16.mxu0 %v593
        %838 = vmatpush1.bf16.msra.mxu0 %v592
        %839 = vmatprep.subr.bf16.mxu0 %v597
        %840 = vmatpush1.bf16.msra.mxu0 %v596
        %841 = vmatprep.subr.bf16.mxu0 %v601
        %842 = vmatpush1.bf16.msra.mxu0 %v600
        %843 = vmatprep.subr.bf16.mxu0 0
        %844 = vmatpush1.bf16.msra.mxu0 0
        %845 = vmatprep.subr.bf16.mxu0 0
        %846 = vmatpush1.bf16.msra.mxu0 0
        %847 = vmatprep.subr.bf16.mxu0 0
        %848 = vmatpush1.bf16.msra.mxu0 0
        %849 = vmatprep.subr.bf16.mxu0 0
        %850 = vmatpush1.bf16.msra.mxu0 0
        %851 = vmatprep.subr.bf16.mxu0 0
        %852 = vmatpush1.bf16.msra.mxu0 0
        %853 = vmatprep.subr.bf16.mxu0 0
        %854 = vmatpush1.bf16.msra.mxu0 0
        %855 = vmatprep.subr.bf16.mxu0 0
        %856 = vmatpush1.bf16.msra.mxu0 0
        %857 = vmatprep.subr.bf16.mxu0 0
        %858 = vmatpush1.bf16.msra.mxu0 0
        %859 = vmatprep.mubr.bf16.mxu0 0
        %860 = vmatmul.mubr.bf16.gmra.mrb[0].mxu0 %v442
        %v861 = vpop.f32.mrb[0].mxu0
        %v862 = vadd.f32 %v373, %v861
        %v863 = vpop.f32.mrb[0].mxu0
        %v864 = vadd.f32 %v377, %v863
        %v865 = vpop.f32.mrb[0].mxu0
        %v866 = vadd.f32 %v373, %v865
        %v867 = vpop.f32.mrb[0].mxu0
        %v868 = vadd.f32 %v377, %v867
        %869 = vmatprep.mubr.bf16.mxu0 0
        %870 = vmatmul.mubr.bf16.gmra.mrb[0].mxu0 %v443
        %v871 = vpop.f32.mrb[0].mxu0
        %v872 = vadd.f32 %v373, %v871
        %v873 = vpop.f32.mrb[0].mxu0
        %v874 = vadd.f32 %v377, %v873
        %v875 = vpop.f32.mrb[0].mxu0
        %v876 = vadd.f32 %v373, %v875
        %v877 = vpop.f32.mrb[0].mxu0
        %v878 = vadd.f32 %v377, %v877
        %879 = vmatprep.mubr.bf16.mxu0 0
        %880 = vmatmul.mubr.bf16.gmra.mrb[0].mxu0 %v444
        %v881 = vpop.f32.mrb[0].mxu0
        %v882 = vadd.f32 %v373, %v881
        %v883 = vpop.f32.mrb[0].mxu0
        %v884 = vadd.f32 %v377, %v883
        %v885 = vpop.f32.mrb[0].mxu0
        %v886 = vadd.f32 %v373, %v885
        %v887 = vpop.f32.mrb[0].mxu0
        %v888 = vadd.f32 %v377, %v887
        %889 = vmatprep.mubr.bf16.mxu0 0
        %890 = vmatmul.mubr.bf16.gmra.mrb[0].mxu0 %v445
        %v891 = vpop.f32.mrb[0].mxu0
        %v892 = vadd.f32 %v373, %v891
        %v893 = vpop.f32.mrb[0].mxu0
        %v894 = vadd.f32 %v377, %v893
        %v895 = vpop.f32.mrb[0].mxu0
        %v896 = vadd.f32 %v373, %v895
        %v897 = vpop.f32.mrb[0].mxu0
        %v898 = vadd.f32 %v377, %v897
        %899 = vmatprep.mubr.bf16.mxu0 0
        %900 = vmatmul.mubr.bf16.gmra.mrb[0].mxu0 %v446
        %v901 = vpop.f32.mrb[0].mxu0
        %v902 = vadd.f32 %v373, %v901
        %v903 = vpop.f32.mrb[0].mxu0
        %v904 = vadd.f32 %v377, %v903
        %v905 = vpop.f32.mrb[0].mxu0
        %v906 = vadd.f32 %v373, %v905
        %v907 = vpop.f32.mrb[0].mxu0
        %v908 = vadd.f32 %v377, %v907
        %909 = vmatprep.mubr.bf16.mxu0 0
        %910 = vmatmul.mubr.bf16.gmra.mrb[0].mxu0 %v447
        %v911 = vpop.f32.mrb[0].mxu0
        %v912 = vadd.f32 %v373, %v911
        %v913 = vpop.f32.mrb[0].mxu0
        %v914 = vadd.f32 %v377, %v913
        %v915 = vpop.f32.mrb[0].mxu0
        %v916 = vadd.f32 %v373, %v915
        %v917 = vpop.f32.mrb[0].mxu0
        %v918 = vadd.f32 %v377, %v917
        %919 = vmatprep.mubr.bf16.mxu0 0
        %920 = vmatmul.mubr.bf16.gmra.mrb[0].mxu0 %v448
        %v921 = vpop.f32.mrb[0].mxu0
        %v922 = vadd.f32 %v373, %v921
        %v923 = vpop.f32.mrb[0].mxu0
        %v924 = vadd.f32 %v377, %v923
        %v925 = vpop.f32.mrb[0].mxu0
        %v926 = vadd.f32 %v373, %v925
        %v927 = vpop.f32.mrb[0].mxu0
        %v928 = vadd.f32 %v377, %v927
        %929 = vmatprep.mubr.bf16.mxu0 0
        %930 = vmatmul.mubr.bf16.gmra.mrb[0].mxu0 %v449
        %v931 = vpop.f32.mrb[0].mxu0
        %v932 = vadd.f32 %v373, %v931
        %v933 = vpop.f32.mrb[0].mxu0
        %v934 = vadd.f32 %v377, %v933
        %v935 = vpop.f32.mrb[0].mxu0
        %v936 = vadd.f32 %v373, %v935
        %v937 = vpop.f32.mrb[0].mxu0
        %v938 = vadd.f32 %v377, %v937
        %939 = vmatprep.mubr.bf16.mxu0 0
        %940 = vmatmul.mubr.bf16.gmra.mrb[0].mxu0 %v450
        %v941 = vpop.f32.mrb[0].mxu0
        %v942 = vadd.f32 %v373, %v941
        %v943 = vpop.f32.mrb[0].mxu0
        %v944 = vadd.f32 %v377, %v943
        %v945 = vpop.f32.mrb[0].mxu0
        %v946 = vadd.f32 %v373, %v945
        %v947 = vpop.f32.mrb[0].mxu0
        %v948 = vadd.f32 %v377, %v947
        %949 = vmatprep.mubr.bf16.mxu0 0
        %950 = vmatmul.mubr.bf16.gmra.mrb[0].mxu0 %v451
        %v951 = vpop.f32.mrb[0].mxu0
        %v952 = vadd.f32 %v373, %v951
        %v953 = vpop.f32.mrb[0].mxu0
        %v954 = vadd.f32 %v377, %v953
        %v955 = vpop.f32.mrb[0].mxu0
        %v956 = vadd.f32 %v373, %v955
        %v957 = vpop.f32.mrb[0].mxu0
        %v958 = vadd.f32 %v377, %v957
        %959 = vmatprep.mubr.bf16.mxu0 0
        %960 = vmatmul.mubr.bf16.gmra.mrb[0].mxu0 %v452
        %v961 = vpop.f32.mrb[0].mxu0
        %v962 = vadd.f32 %v373, %v961
        %v963 = vpop.f32.mrb[0].mxu0
        %v964 = vadd.f32 %v377, %v963
        %v965 = vpop.f32.mrb[0].mxu0
        %v966 = vadd.f32 %v373, %v965
        %v967 = vpop.f32.mrb[0].mxu0
        %v968 = vadd.f32 %v377, %v967
        %969 = vmatprep.mubr.bf16.mxu0 0
        %970 = vmatmul.mubr.bf16.gmra.mrb[0].mxu0 %v453
        %v971 = vpop.f32.mrb[0].mxu0
        %v972 = vadd.f32 %v373, %v971
        %v973 = vpop.f32.mrb[0].mxu0
        %v974 = vadd.f32 %v377, %v973
        %v975 = vpop.f32.mrb[0].mxu0
        %v976 = vadd.f32 %v373, %v975
        %v977 = vpop.f32.mrb[0].mxu0
        %v978 = vadd.f32 %v377, %v977
        %979 = vmatprep.mubr.bf16.mxu0 0
        %980 = vmatmul.mubr.bf16.gmra.mrb[0].mxu0 %v454
        %v981 = vpop.f32.mrb[0].mxu0
        %v982 = vadd.f32 %v373, %v981
        %v983 = vpop.f32.mrb[0].mxu0
        %v984 = vadd.f32 %v377, %v983
        %v985 = vpop.f32.mrb[0].mxu0
        %v986 = vadd.f32 %v373, %v985
        %v987 = vpop.f32.mrb[0].mxu0
        %v988 = vadd.f32 %v377, %v987
        %989 = vmatprep.mubr.bf16.mxu0 0
        %990 = vmatmul.mubr.bf16.gmra.mrb[0].mxu0 %v455
        %v991 = vpop.f32.mrb[0].mxu0
        %v992 = vadd.f32 %v373, %v991
        %v993 = vpop.f32.mrb[0].mxu0
        %v994 = vadd.f32 %v377, %v993
        %v995 = vpop.f32.mrb[0].mxu0
        %v996 = vadd.f32 %v373, %v995
        %v997 = vpop.f32.mrb[0].mxu0
        %v998 = vadd.f32 %v377, %v997
        %999 = vmatprep.mubr.bf16.mxu0 0
        %1000 = vmatmul.mubr.bf16.gmra.mrb[0].mxu0 %v456
        %v1001 = vpop.f32.mrb[0].mxu0
        %v1002 = vadd.f32 %v373, %v1001
        %v1003 = vpop.f32.mrb[0].mxu0
        %v1004 = vadd.f32 %v377, %v1003
        %v1005 = vpop.f32.mrb[0].mxu0
        %v1006 = vadd.f32 %v373, %v1005
        %v1007 = vpop.f32.mrb[0].mxu0
        %v1008 = vadd.f32 %v377, %v1007
        %1009 = vmatprep.mubr.bf16.mxu0 0
        %1010 = vmatmul.mubr.bf16.gmra.mrb[0].mxu0 %v457
        %v1011 = vpop.f32.mrb[0].mxu0
        %v1012 = vadd.f32 %v373, %v1011
        %v1013 = vpop.f32.mrb[0].mxu0
        %v1014 = vadd.f32 %v377, %v1013
        %v1015 = vpop.f32.mrb[0].mxu0
        %v1016 = vadd.f32 %v373, %v1015
        %v1017 = vpop.f32.mrb[0].mxu0
        %v1018 = vadd.f32 %v377, %v1017
        %1019 = vdwg.mxu0
        %v1020 = vmul.f32 %v669, 0.035677407
        %v1021 = vmul.f32 %v671, 0.035677407
        %v1022 = vmul.f32 %v862, 0.035677407
        %v1023 = vmul.f32 %v864, 0.035677407
        %v1024 = vmul.f32 %v673, 0.035677407
        %v1025 = vmul.f32 %v675, 0.035677407
        %v1026 = vmul.f32 %v866, 0.035677407
        %v1027 = vmul.f32 %v868, 0.035677407
        %v1028 = vmul.f32 %v679, 0.035677407
        %v1029 = vmul.f32 %v681, 0.035677407
        %v1030 = vmul.f32 %v872, 0.035677407
        %v1031 = vmul.f32 %v874, 0.035677407
        %v1032 = vmul.f32 %v683, 0.035677407
        %v1033 = vmul.f32 %v685, 0.035677407
        %v1034 = vmul.f32 %v876, 0.035677407
        %v1035 = vmul.f32 %v878, 0.035677407
        %v1036 = vmul.f32 %v689, 0.035677407
        %v1037 = vmul.f32 %v691, 0.035677407
        %v1038 = vmul.f32 %v882, 0.035677407
        %v1039 = vmul.f32 %v884, 0.035677407
        %v1040 = vmul.f32 %v693, 0.035677407
        %v1041 = vmul.f32 %v695, 0.035677407
        %v1042 = vmul.f32 %v886, 0.035677407
        %v1043 = vmul.f32 %v888, 0.035677407
        %v1044 = vmul.f32 %v699, 0.035677407
        %v1045 = vmul.f32 %v701, 0.035677407
        %v1046 = vmul.f32 %v892, 0.035677407
        %v1047 = vmul.f32 %v894, 0.035677407
        %v1048 = vmul.f32 %v703, 0.035677407
        %v1049 = vmul.f32 %v705, 0.035677407
        %v1050 = vmul.f32 %v896, 0.035677407
        %v1051 = vmul.f32 %v898, 0.035677407
        %v1052 = vmul.f32 %v709, 0.035677407
        %v1053 = vmul.f32 %v711, 0.035677407
        %v1054 = vmul.f32 %v902, 0.035677407
        %v1055 = vmul.f32 %v904, 0.035677407
        %v1056 = vmul.f32 %v713, 0.035677407
        %v1057 = vmul.f32 %v715, 0.035677407
        %v1058 = vmul.f32 %v906, 0.035677407
        %v1059 = vmul.f32 %v908, 0.035677407
        %v1060 = vmul.f32 %v719, 0.035677407
        %v1061 = vmul.f32 %v721, 0.035677407
        %v1062 = vmul.f32 %v912, 0.035677407
        %v1063 = vmul.f32 %v914, 0.035677407
        %v1064 = vmul.f32 %v723, 0.035677407
        %v1065 = vmul.f32 %v725, 0.035677407
        %v1066 = vmul.f32 %v916, 0.035677407
        %v1067 = vmul.f32 %v918, 0.035677407
        %v1068 = vmul.f32 %v729, 0.035677407
        %v1069 = vmul.f32 %v731, 0.035677407
        %v1070 = vmul.f32 %v922, 0.035677407
        %v1071 = vmul.f32 %v924, 0.035677407
        %v1072 = vmul.f32 %v733, 0.035677407
        %v1073 = vmul.f32 %v735, 0.035677407
        %v1074 = vmul.f32 %v926, 0.035677407
        %v1075 = vmul.f32 %v928, 0.035677407
        %v1076 = vmul.f32 %v739, 0.035677407
        %v1077 = vmul.f32 %v741, 0.035677407
        %v1078 = vmul.f32 %v932, 0.035677407
        %v1079 = vmul.f32 %v934, 0.035677407
        %v1080 = vmul.f32 %v743, 0.035677407
        %v1081 = vmul.f32 %v745, 0.035677407
        %v1082 = vmul.f32 %v936, 0.035677407
        %v1083 = vmul.f32 %v938, 0.035677407
        %v1084 = vmul.f32 %v749, 0.035677407
        %v1085 = vmul.f32 %v751, 0.035677407
        %v1086 = vmul.f32 %v942, 0.035677407
        %v1087 = vmul.f32 %v944, 0.035677407
        %v1088 = vmul.f32 %v753, 0.035677407
        %v1089 = vmul.f32 %v755, 0.035677407
        %v1090 = vmul.f32 %v946, 0.035677407
        %v1091 = vmul.f32 %v948, 0.035677407
        %v1092 = vmul.f32 %v759, 0.035677407
        %v1093 = vmul.f32 %v761, 0.035677407
        %v1094 = vmul.f32 %v952, 0.035677407
        %v1095 = vmul.f32 %v954, 0.035677407
        %v1096 = vmul.f32 %v763, 0.035677407
        %v1097 = vmul.f32 %v765, 0.035677407
        %v1098 = vmul.f32 %v956, 0.035677407
        %v1099 = vmul.f32 %v958, 0.035677407
        %v1100 = vmul.f32 %v769, 0.035677407
        %v1101 = vmul.f32 %v771, 0.035677407
        %v1102 = vmul.f32 %v962, 0.035677407
        %v1103 = vmul.f32 %v964, 0.035677407
        %v1104 = vmul.f32 %v773, 0.035677407
        %v1105 = vmul.f32 %v775, 0.035677407
        %v1106 = vmul.f32 %v966, 0.035677407
        %v1107 = vmul.f32 %v968, 0.035677407
        %v1108 = vmul.f32 %v779, 0.035677407
        %v1109 = vmul.f32 %v781, 0.035677407
        %v1110 = vmul.f32 %v972, 0.035677407
        %v1111 = vmul.f32 %v974, 0.035677407
        %v1112 = vmul.f32 %v783, 0.035677407
        %v1113 = vmul.f32 %v785, 0.035677407
        %v1114 = vmul.f32 %v976, 0.035677407
        %v1115 = vmul.f32 %v978, 0.035677407
        %v1116 = vmul.f32 %v789, 0.035677407
        %v1117 = vmul.f32 %v791, 0.035677407
        %v1118 = vmul.f32 %v982, 0.035677407
        %v1119 = vmul.f32 %v984, 0.035677407
        %v1120 = vmul.f32 %v793, 0.035677407
        %v1121 = vmul.f32 %v795, 0.035677407
        %v1122 = vmul.f32 %v986, 0.035677407
        %v1123 = vmul.f32 %v988, 0.035677407
        %v1124 = vmul.f32 %v799, 0.035677407
        %v1125 = vmul.f32 %v801, 0.035677407
        %v1126 = vmul.f32 %v992, 0.035677407
        %v1127 = vmul.f32 %v994, 0.035677407
        %v1128 = vmul.f32 %v803, 0.035677407
        %v1129 = vmul.f32 %v805, 0.035677407
        %v1130 = vmul.f32 %v996, 0.035677407
        %v1131 = vmul.f32 %v998, 0.035677407
        %v1132 = vmul.f32 %v809, 0.035677407
        %v1133 = vmul.f32 %v811, 0.035677407
        %v1134 = vmul.f32 %v1002, 0.035677407
        %v1135 = vmul.f32 %v1004, 0.035677407
        %v1136 = vmul.f32 %v813, 0.035677407
        %v1137 = vmul.f32 %v815, 0.035677407
        %v1138 = vmul.f32 %v1006, 0.035677407
        %v1139 = vmul.f32 %v1008, 0.035677407
        %v1140 = vmul.f32 %v819, 0.035677407
        %v1141 = vmul.f32 %v821, 0.035677407
        %v1142 = vmul.f32 %v1012, 0.035677407
        %v1143 = vmul.f32 %v1014, 0.035677407
        %v1144 = vmul.f32 %v823, 0.035677407
        %v1145 = vmul.f32 %v825, 0.035677407
        %v1146 = vmul.f32 %v1016, 0.035677407
        %v1147 = vmul.f32 %v1018, 0.035677407
        %v1148 = vmul.f32 %v1020, %v669
        %v1149 = vmul.f32 %v1021, %v671
        %v1150 = vmul.f32 %v1022, %v862
        %v1151 = vmul.f32 %v1023, %v864
        %v1152 = vmul.f32 %v1024, %v673
        %v1153 = vmul.f32 %v1025, %v675
        %v1154 = vmul.f32 %v1026, %v866
        %v1155 = vmul.f32 %v1027, %v868
        %v1156 = vmul.f32 %v1028, %v679
        %v1157 = vmul.f32 %v1029, %v681
        %v1158 = vmul.f32 %v1030, %v872
        %v1159 = vmul.f32 %v1031, %v874
        %v1160 = vmul.f32 %v1032, %v683
        %v1161 = vmul.f32 %v1033, %v685
        %v1162 = vmul.f32 %v1034, %v876
        %v1163 = vmul.f32 %v1035, %v878
        %v1164 = vmul.f32 %v1036, %v689
        %v1165 = vmul.f32 %v1037, %v691
        %v1166 = vmul.f32 %v1038, %v882
        %v1167 = vmul.f32 %v1039, %v884
        %v1168 = vmul.f32 %v1040, %v693
        %v1169 = vmul.f32 %v1041, %v695
        %v1170 = vmul.f32 %v1042, %v886
        %v1171 = vmul.f32 %v1043, %v888
        %v1172 = vmul.f32 %v1044, %v699
        %v1173 = vmul.f32 %v1045, %v701
        %v1174 = vmul.f32 %v1046, %v892
        %v1175 = vmul.f32 %v1047, %v894
        %v1176 = vmul.f32 %v1048, %v703
        %v1177 = vmul.f32 %v1049, %v705
        %v1178 = vmul.f32 %v1050, %v896
        %v1179 = vmul.f32 %v1051, %v898
        %v1180 = vmul.f32 %v1052, %v709
        %v1181 = vmul.f32 %v1053, %v711
        %v1182 = vmul.f32 %v1054, %v902
        %v1183 = vmul.f32 %v1055, %v904
        %v1184 = vmul.f32 %v1056, %v713
        %v1185 = vmul.f32 %v1057, %v715
        %v1186 = vmul.f32 %v1058, %v906
        %v1187 = vmul.f32 %v1059, %v908
        %v1188 = vmul.f32 %v1060, %v719
        %v1189 = vmul.f32 %v1061, %v721
        %v1190 = vmul.f32 %v1062, %v912
        %v1191 = vmul.f32 %v1063, %v914
        %v1192 = vmul.f32 %v1064, %v723
        %v1193 = vmul.f32 %v1065, %v725
        %v1194 = vmul.f32 %v1066, %v916
        %v1195 = vmul.f32 %v1067, %v918
        %v1196 = vmul.f32 %v1068, %v729
        %v1197 = vmul.f32 %v1069, %v731
        %v1198 = vmul.f32 %v1070, %v922
        %v1199 = vmul.f32 %v1071, %v924
        %v1200 = vmul.f32 %v1072, %v733
        %v1201 = vmul.f32 %v1073, %v735
        %v1202 = vmul.f32 %v1074, %v926
        %v1203 = vmul.f32 %v1075, %v928
        %v1204 = vmul.f32 %v1076, %v739
        %v1205 = vmul.f32 %v1077, %v741
        %v1206 = vmul.f32 %v1078, %v932
        %v1207 = vmul.f32 %v1079, %v934
        %v1208 = vmul.f32 %v1080, %v743
        %v1209 = vmul.f32 %v1081, %v745
        %v1210 = vmul.f32 %v1082, %v936
        %v1211 = vmul.f32 %v1083, %v938
        %v1212 = vmul.f32 %v1084, %v749
        %v1213 = vmul.f32 %v1085, %v751
        %v1214 = vmul.f32 %v1086, %v942
        %v1215 = vmul.f32 %v1087, %v944
        %v1216 = vmul.f32 %v1088, %v753
        %v1217 = vmul.f32 %v1089, %v755
        %v1218 = vmul.f32 %v1090, %v946
        %v1219 = vmul.f32 %v1091, %v948
        %v1220 = vmul.f32 %v1092, %v759
        %v1221 = vmul.f32 %v1093, %v761
        %v1222 = vmul.f32 %v1094, %v952
        %v1223 = vmul.f32 %v1095, %v954
        %v1224 = vmul.f32 %v1096, %v763
        %v1225 = vmul.f32 %v1097, %v765
        %v1226 = vmul.f32 %v1098, %v956
        %v1227 = vmul.f32 %v1099, %v958
        %v1228 = vmul.f32 %v1100, %v769
        %v1229 = vmul.f32 %v1101, %v771
        %v1230 = vmul.f32 %v1102, %v962
        %v1231 = vmul.f32 %v1103, %v964
        %v1232 = vmul.f32 %v1104, %v773
        %v1233 = vmul.f32 %v1105, %v775
        %v1234 = vmul.f32 %v1106, %v966
        %v1235 = vmul.f32 %v1107, %v968
        %v1236 = vmul.f32 %v1108, %v779
        %v1237 = vmul.f32 %v1109, %v781
        %v1238 = vmul.f32 %v1110, %v972
        %v1239 = vmul.f32 %v1111, %v974
        %v1240 = vmul.f32 %v1112, %v783
        %v1241 = vmul.f32 %v1113, %v785
        %v1242 = vmul.f32 %v1114, %v976
        %v1243 = vmul.f32 %v1115, %v978
        %v1244 = vmul.f32 %v1116, %v789
        %v1245 = vmul.f32 %v1117, %v791
        %v1246 = vmul.f32 %v1118, %v982
        %v1247 = vmul.f32 %v1119, %v984
        %v1248 = vmul.f32 %v1120, %v793
        %v1249 = vmul.f32 %v1121, %v795
        %v1250 = vmul.f32 %v1122, %v986
        %v1251 = vmul.f32 %v1123, %v988
        %v1252 = vmul.f32 %v1124, %v799
        %v1253 = vmul.f32 %v1125, %v801
        %v1254 = vmul.f32 %v1126, %v992
        %v1255 = vmul.f32 %v1127, %v994
        %v1256 = vmul.f32 %v1128, %v803
        %v1257 = vmul.f32 %v1129, %v805
        %v1258 = vmul.f32 %v1130, %v996
        %v1259 = vmul.f32 %v1131, %v998
        %v1260 = vmul.f32 %v1132, %v809
        %v1261 = vmul.f32 %v1133, %v811
        %v1262 = vmul.f32 %v1134, %v1002
        %v1263 = vmul.f32 %v1135, %v1004
        %v1264 = vmul.f32 %v1136, %v813
        %v1265 = vmul.f32 %v1137, %v815
        %v1266 = vmul.f32 %v1138, %v1006
        %v1267 = vmul.f32 %v1139, %v1008
        %v1268 = vmul.f32 %v1140, %v819
        %v1269 = vmul.f32 %v1141, %v821
        %v1270 = vmul.f32 %v1142, %v1012
        %v1271 = vmul.f32 %v1143, %v1014
        %v1272 = vmul.f32 %v1144, %v823
        %v1273 = vmul.f32 %v1145, %v825
        %v1274 = vmul.f32 %v1146, %v1016
        %v1275 = vmul.f32 %v1147, %v1018
        %v1276 = vadd.f32 %v1148, 0.7978846
        %v1277 = vadd.f32 %v1149, 0.7978846
        %v1278 = vadd.f32 %v1150, 0.7978846
        %v1279 = vadd.f32 %v1151, 0.7978846
        %v1280 = vadd.f32 %v1152, 0.7978846
        %v1281 = vadd.f32 %v1153, 0.7978846
        %v1282 = vadd.f32 %v1154, 0.7978846
        %v1283 = vadd.f32 %v1155, 0.7978846
        %v1284 = vadd.f32 %v1156, 0.7978846
        %v1285 = vadd.f32 %v1157, 0.7978846
        %v1286 = vadd.f32 %v1158, 0.7978846
        %v1287 = vadd.f32 %v1159, 0.7978846
        %v1288 = vadd.f32 %v1160, 0.7978846
        %v1289 = vadd.f32 %v1161, 0.7978846
        %v1290 = vadd.f32 %v1162, 0.7978846
        %v1291 = vadd.f32 %v1163, 0.7978846
        %v1292 = vadd.f32 %v1164, 0.7978846
        %v1293 = vadd.f32 %v1165, 0.7978846
        %v1294 = vadd.f32 %v1166, 0.7978846
        %v1295 = vadd.f32 %v1167, 0.7978846
        %v1296 = vadd.f32 %v1168, 0.7978846
        %v1297 = vadd.f32 %v1169, 0.7978846
        %v1298 = vadd.f32 %v1170, 0.7978846
        %v1299 = vadd.f32 %v1171, 0.7978846
        %v1300 = vadd.f32 %v1172, 0.7978846
        %v1301 = vadd.f32 %v1173, 0.7978846
        %v1302 = vadd.f32 %v1174, 0.7978846
        %v1303 = vadd.f32 %v1175, 0.7978846
        %v1304 = vadd.f32 %v1176, 0.7978846
        %v1305 = vadd.f32 %v1177, 0.7978846
        %v1306 = vadd.f32 %v1178, 0.7978846
        %v1307 = vadd.f32 %v1179, 0.7978846
        %v1308 = vadd.f32 %v1180, 0.7978846
        %v1309 = vadd.f32 %v1181, 0.7978846
        %v1310 = vadd.f32 %v1182, 0.7978846
        %v1311 = vadd.f32 %v1183, 0.7978846
        %v1312 = vadd.f32 %v1184, 0.7978846
        %v1313 = vadd.f32 %v1185, 0.7978846
        %v1314 = vadd.f32 %v1186, 0.7978846
        %v1315 = vadd.f32 %v1187, 0.7978846
        %v1316 = vadd.f32 %v1188, 0.7978846
        %v1317 = vadd.f32 %v1189, 0.7978846
        %v1318 = vadd.f32 %v1190, 0.7978846
        %v1319 = vadd.f32 %v1191, 0.7978846
        %v1320 = vadd.f32 %v1192, 0.7978846
        %v1321 = vadd.f32 %v1193, 0.7978846
        %v1322 = vadd.f32 %v1194, 0.7978846
        %v1323 = vadd.f32 %v1195, 0.7978846
        %v1324 = vadd.f32 %v1196, 0.7978846
        %v1325 = vadd.f32 %v1197, 0.7978846
        %v1326 = vadd.f32 %v1198, 0.7978846
        %v1327 = vadd.f32 %v1199, 0.7978846
        %v1328 = vadd.f32 %v1200, 0.7978846
        %v1329 = vadd.f32 %v1201, 0.7978846
        %v1330 = vadd.f32 %v1202, 0.7978846
        %v1331 = vadd.f32 %v1203, 0.7978846
        %v1332 = vadd.f32 %v1204, 0.7978846
        %v1333 = vadd.f32 %v1205, 0.7978846
        %v1334 = vadd.f32 %v1206, 0.7978846
        %v1335 = vadd.f32 %v1207, 0.7978846
        %v1336 = vadd.f32 %v1208, 0.7978846
        %v1337 = vadd.f32 %v1209, 0.7978846
        %v1338 = vadd.f32 %v1210, 0.7978846
        %v1339 = vadd.f32 %v1211, 0.7978846
        %v1340 = vadd.f32 %v1212, 0.7978846
        %v1341 = vadd.f32 %v1213, 0.7978846
        %v1342 = vadd.f32 %v1214, 0.7978846
        %v1343 = vadd.f32 %v1215, 0.7978846
        %v1344 = vadd.f32 %v1216, 0.7978846
        %v1345 = vadd.f32 %v1217, 0.7978846
        %v1346 = vadd.f32 %v1218, 0.7978846
        %v1347 = vadd.f32 %v1219, 0.7978846
        %v1348 = vadd.f32 %v1220, 0.7978846
        %v1349 = vadd.f32 %v1221, 0.7978846
        %v1350 = vadd.f32 %v1222, 0.7978846
        %v1351 = vadd.f32 %v1223, 0.7978846
        %v1352 = vadd.f32 %v1224, 0.7978846
        %v1353 = vadd.f32 %v1225, 0.7978846
        %v1354 = vadd.f32 %v1226, 0.7978846
        %v1355 = vadd.f32 %v1227, 0.7978846
        %v1356 = vadd.f32 %v1228, 0.7978846
        %v1357 = vadd.f32 %v1229, 0.7978846
        %v1358 = vadd.f32 %v1230, 0.7978846
        %v1359 = vadd.f32 %v1231, 0.7978846
        %v1360 = vadd.f32 %v1232, 0.7978846
        %v1361 = vadd.f32 %v1233, 0.7978846
        %v1362 = vadd.f32 %v1234, 0.7978846
        %v1363 = vadd.f32 %v1235, 0.7978846
        %v1364 = vadd.f32 %v1236, 0.7978846
        %v1365 = vadd.f32 %v1237, 0.7978846
        %v1366 = vadd.f32 %v1238, 0.7978846
        %v1367 = vadd.f32 %v1239, 0.7978846
        %v1368 = vadd.f32 %v1240, 0.7978846
        %v1369 = vadd.f32 %v1241, 0.7978846
        %v1370 = vadd.f32 %v1242, 0.7978846
        %v1371 = vadd.f32 %v1243, 0.7978846
        %v1372 = vadd.f32 %v1244, 0.7978846
        %v1373 = vadd.f32 %v1245, 0.7978846
        %v1374 = vadd.f32 %v1246, 0.7978846
        %v1375 = vadd.f32 %v1247, 0.7978846
        %v1376 = vadd.f32 %v1248, 0.7978846
        %v1377 = vadd.f32 %v1249, 0.7978846
        %v1378 = vadd.f32 %v1250, 0.7978846
        %v1379 = vadd.f32 %v1251, 0.7978846
        %v1380 = vadd.f32 %v1252, 0.7978846
        %v1381 = vadd.f32 %v1253, 0.7978846
        %v1382 = vadd.f32 %v1254, 0.7978846
        %v1383 = vadd.f32 %v1255, 0.7978846
        %v1384 = vadd.f32 %v1256, 0.7978846
        %v1385 = vadd.f32 %v1257, 0.7978846
        %v1386 = vadd.f32 %v1258, 0.7978846
        %v1387 = vadd.f32 %v1259, 0.7978846
        %v1388 = vadd.f32 %v1260, 0.7978846
        %v1389 = vadd.f32 %v1261, 0.7978846
        %v1390 = vadd.f32 %v1262, 0.7978846
        %v1391 = vadd.f32 %v1263, 0.7978846
        %v1392 = vadd.f32 %v1264, 0.7978846
        %v1393 = vadd.f32 %v1265, 0.7978846
        %v1394 = vadd.f32 %v1266, 0.7978846
        %v1395 = vadd.f32 %v1267, 0.7978846
        %v1396 = vadd.f32 %v1268, 0.7978846
        %v1397 = vadd.f32 %v1269, 0.7978846
        %v1398 = vadd.f32 %v1270, 0.7978846
        %v1399 = vadd.f32 %v1271, 0.7978846
        %v1400 = vadd.f32 %v1272, 0.7978846
        %v1401 = vadd.f32 %v1273, 0.7978846
        %v1402 = vadd.f32 %v1274, 0.7978846
        %v1403 = vadd.f32 %v1275, 0.7978846
        %v1404 = vmul.f32 %v669, %v1276
        %v1405 = vmul.f32 %v671, %v1277
        %v1406 = vmul.f32 %v862, %v1278
        %v1407 = vmul.f32 %v864, %v1279
        %v1408 = vmul.f32 %v673, %v1280
        %v1409 = vmul.f32 %v675, %v1281
        %v1410 = vmul.f32 %v866, %v1282
        %v1411 = vmul.f32 %v868, %v1283
        %v1412 = vmul.f32 %v679, %v1284
        %v1413 = vmul.f32 %v681, %v1285
        %v1414 = vmul.f32 %v872, %v1286
        %v1415 = vmul.f32 %v874, %v1287
        %v1416 = vmul.f32 %v683, %v1288
        %v1417 = vmul.f32 %v685, %v1289
        %v1418 = vmul.f32 %v876, %v1290
        %v1419 = vmul.f32 %v878, %v1291
        %v1420 = vmul.f32 %v689, %v1292
        %v1421 = vmul.f32 %v691, %v1293
        %v1422 = vmul.f32 %v882, %v1294
        %v1423 = vmul.f32 %v884, %v1295
        %v1424 = vmul.f32 %v693, %v1296
        %v1425 = vmul.f32 %v695, %v1297
        %v1426 = vmul.f32 %v886, %v1298
        %v1427 = vmul.f32 %v888, %v1299
        %v1428 = vmul.f32 %v699, %v1300
        %v1429 = vmul.f32 %v701, %v1301
        %v1430 = vmul.f32 %v892, %v1302
        %v1431 = vmul.f32 %v894, %v1303
        %v1432 = vmul.f32 %v703, %v1304
        %v1433 = vmul.f32 %v705, %v1305
        %v1434 = vmul.f32 %v896, %v1306
        %v1435 = vmul.f32 %v898, %v1307
        %v1436 = vmul.f32 %v709, %v1308
        %v1437 = vmul.f32 %v711, %v1309
        %v1438 = vmul.f32 %v902, %v1310
        %v1439 = vmul.f32 %v904, %v1311
        %v1440 = vmul.f32 %v713, %v1312
        %v1441 = vmul.f32 %v715, %v1313
        %v1442 = vmul.f32 %v906, %v1314
        %v1443 = vmul.f32 %v908, %v1315
        %v1444 = vmul.f32 %v719, %v1316
        %v1445 = vmul.f32 %v721, %v1317
        %v1446 = vmul.f32 %v912, %v1318
        %v1447 = vmul.f32 %v914, %v1319
        %v1448 = vmul.f32 %v723, %v1320
        %v1449 = vmul.f32 %v725, %v1321
        %v1450 = vmul.f32 %v916, %v1322
        %v1451 = vmul.f32 %v918, %v1323
        %v1452 = vmul.f32 %v729, %v1324
        %v1453 = vmul.f32 %v731, %v1325
        %v1454 = vmul.f32 %v922, %v1326
        %v1455 = vmul.f32 %v924, %v1327
        %v1456 = vmul.f32 %v733, %v1328
        %v1457 = vmul.f32 %v735, %v1329
        %v1458 = vmul.f32 %v926, %v1330
        %v1459 = vmul.f32 %v928, %v1331
        %v1460 = vmul.f32 %v739, %v1332
        %v1461 = vmul.f32 %v741, %v1333
        %v1462 = vmul.f32 %v932, %v1334
        %v1463 = vmul.f32 %v934, %v1335
        %v1464 = vmul.f32 %v743, %v1336
        %v1465 = vmul.f32 %v745, %v1337
        %v1466 = vmul.f32 %v936, %v1338
        %v1467 = vmul.f32 %v938, %v1339
        %v1468 = vmul.f32 %v749, %v1340
        %v1469 = vmul.f32 %v751, %v1341
        %v1470 = vmul.f32 %v942, %v1342
        %v1471 = vmul.f32 %v944, %v1343
        %v1472 = vmul.f32 %v753, %v1344
        %v1473 = vmul.f32 %v755, %v1345
        %v1474 = vmul.f32 %v946, %v1346
        %v1475 = vmul.f32 %v948, %v1347
        %v1476 = vmul.f32 %v759, %v1348
        %v1477 = vmul.f32 %v761, %v1349
        %v1478 = vmul.f32 %v952, %v1350
        %v1479 = vmul.f32 %v954, %v1351
        %v1480 = vmul.f32 %v763, %v1352
        %v1481 = vmul.f32 %v765, %v1353
        %v1482 = vmul.f32 %v956, %v1354
        %v1483 = vmul.f32 %v958, %v1355
        %v1484 = vmul.f32 %v769, %v1356
        %v1485 = vmul.f32 %v771, %v1357
        %v1486 = vmul.f32 %v962, %v1358
        %v1487 = vmul.f32 %v964, %v1359
        %v1488 = vmul.f32 %v773, %v1360
        %v1489 = vmul.f32 %v775, %v1361
        %v1490 = vmul.f32 %v966, %v1362
        %v1491 = vmul.f32 %v968, %v1363
        %v1492 = vmul.f32 %v779, %v1364
        %v1493 = vmul.f32 %v781, %v1365
        %v1494 = vmul.f32 %v972, %v1366
        %v1495 = vmul.f32 %v974, %v1367
        %v1496 = vmul.f32 %v783, %v1368
        %v1497 = vmul.f32 %v785, %v1369
        %v1498 = vmul.f32 %v976, %v1370
        %v1499 = vmul.f32 %v978, %v1371
        %v1500 = vmul.f32 %v789, %v1372
        %v1501 = vmul.f32 %v791, %v1373
        %v1502 = vmul.f32 %v982, %v1374
        %v1503 = vmul.f32 %v984, %v1375
        %v1504 = vmul.f32 %v793, %v1376
        %v1505 = vmul.f32 %v795, %v1377
        %v1506 = vmul.f32 %v986, %v1378
        %v1507 = vmul.f32 %v988, %v1379
        %v1508 = vmul.f32 %v799, %v1380
        %v1509 = vmul.f32 %v801, %v1381
        %v1510 = vmul.f32 %v992, %v1382
        %v1511 = vmul.f32 %v994, %v1383
        %v1512 = vmul.f32 %v803, %v1384
        %v1513 = vmul.f32 %v805, %v1385
        %v1514 = vmul.f32 %v996, %v1386
        %v1515 = vmul.f32 %v998, %v1387
        %v1516 = vmul.f32 %v809, %v1388
        %v1517 = vmul.f32 %v811, %v1389
        %v1518 = vmul.f32 %v1002, %v1390
        %v1519 = vmul.f32 %v1004, %v1391
        %v1520 = vmul.f32 %v813, %v1392
        %v1521 = vmul.f32 %v815, %v1393
        %v1522 = vmul.f32 %v1006, %v1394
        %v1523 = vmul.f32 %v1008, %v1395
        %v1524 = vmul.f32 %v819, %v1396
        %v1525 = vmul.f32 %v821, %v1397
        %v1526 = vmul.f32 %v1012, %v1398
        %v1527 = vmul.f32 %v1014, %v1399
        %v1528 = vmul.f32 %v823, %v1400
        %v1529 = vmul.f32 %v825, %v1401
        %v1530 = vmul.f32 %v1016, %v1402
        %v1531 = vmul.f32 %v1018, %v1403
        %v1532 = vmul.f32 %v669, 0.5
        %v1533 = vmul.f32 %v671, 0.5
        %v1534 = vmul.f32 %v862, 0.5
        %v1535 = vmul.f32 %v864, 0.5
        %v1536 = vmul.f32 %v673, 0.5
        %v1537 = vmul.f32 %v675, 0.5
        %v1538 = vmul.f32 %v866, 0.5
        %v1539 = vmul.f32 %v868, 0.5
        %v1540 = vmul.f32 %v679, 0.5
        %v1541 = vmul.f32 %v681, 0.5
        %v1542 = vmul.f32 %v872, 0.5
        %v1543 = vmul.f32 %v874, 0.5
        %v1544 = vmul.f32 %v683, 0.5
        %v1545 = vmul.f32 %v685, 0.5
        %v1546 = vmul.f32 %v876, 0.5
        %v1547 = vmul.f32 %v878, 0.5
        %v1548 = vmul.f32 %v689, 0.5
        %v1549 = vmul.f32 %v691, 0.5
        %v1550 = vmul.f32 %v882, 0.5
        %v1551 = vmul.f32 %v884, 0.5
        %v1552 = vmul.f32 %v693, 0.5
        %v1553 = vmul.f32 %v695, 0.5
        %v1554 = vmul.f32 %v886, 0.5
        %v1555 = vmul.f32 %v888, 0.5
        %v1556 = vmul.f32 %v699, 0.5
        %v1557 = vmul.f32 %v701, 0.5
        %v1558 = vmul.f32 %v892, 0.5
        %v1559 = vmul.f32 %v894, 0.5
        %v1560 = vmul.f32 %v703, 0.5
        %v1561 = vmul.f32 %v705, 0.5
        %v1562 = vmul.f32 %v896, 0.5
        %v1563 = vmul.f32 %v898, 0.5
        %v1564 = vmul.f32 %v709, 0.5
        %v1565 = vmul.f32 %v711, 0.5
        %v1566 = vmul.f32 %v902, 0.5
        %v1567 = vmul.f32 %v904, 0.5
        %v1568 = vmul.f32 %v713, 0.5
        %v1569 = vmul.f32 %v715, 0.5
        %v1570 = vmul.f32 %v906, 0.5
        %v1571 = vmul.f32 %v908, 0.5
        %v1572 = vmul.f32 %v719, 0.5
        %v1573 = vmul.f32 %v721, 0.5
        %v1574 = vmul.f32 %v912, 0.5
        %v1575 = vmul.f32 %v914, 0.5
        %v1576 = vmul.f32 %v723, 0.5
        %v1577 = vmul.f32 %v725, 0.5
        %v1578 = vmul.f32 %v916, 0.5
        %v1579 = vmul.f32 %v918, 0.5
        %v1580 = vmul.f32 %v729, 0.5
        %v1581 = vmul.f32 %v731, 0.5
        %v1582 = vmul.f32 %v922, 0.5
        %v1583 = vmul.f32 %v924, 0.5
        %v1584 = vmul.f32 %v733, 0.5
        %v1585 = vmul.f32 %v735, 0.5
        %v1586 = vmul.f32 %v926, 0.5
        %v1587 = vmul.f32 %v928, 0.5
        %v1588 = vmul.f32 %v739, 0.5
        %v1589 = vmul.f32 %v741, 0.5
        %v1590 = vmul.f32 %v932, 0.5
        %v1591 = vmul.f32 %v934, 0.5
        %v1592 = vmul.f32 %v743, 0.5
        %v1593 = vmul.f32 %v745, 0.5
        %v1594 = vmul.f32 %v936, 0.5
        %v1595 = vmul.f32 %v938, 0.5
        %v1596 = vmul.f32 %v749, 0.5
        %v1597 = vmul.f32 %v751, 0.5
        %v1598 = vmul.f32 %v942, 0.5
        %v1599 = vmul.f32 %v944, 0.5
        %v1600 = vmul.f32 %v753, 0.5
        %v1601 = vmul.f32 %v755, 0.5
        %v1602 = vmul.f32 %v946, 0.5
        %v1603 = vmul.f32 %v948, 0.5
        %v1604 = vmul.f32 %v759, 0.5
        %v1605 = vmul.f32 %v761, 0.5
        %v1606 = vmul.f32 %v952, 0.5
        %v1607 = vmul.f32 %v954, 0.5
        %v1608 = vmul.f32 %v763, 0.5
        %v1609 = vmul.f32 %v765, 0.5
        %v1610 = vmul.f32 %v956, 0.5
        %v1611 = vmul.f32 %v958, 0.5
        %v1612 = vmul.f32 %v769, 0.5
        %v1613 = vmul.f32 %v771, 0.5
        %v1614 = vmul.f32 %v962, 0.5
        %v1615 = vmul.f32 %v964, 0.5
        %v1616 = vmul.f32 %v773, 0.5
        %v1617 = vmul.f32 %v775, 0.5
        %v1618 = vmul.f32 %v966, 0.5
        %v1619 = vmul.f32 %v968, 0.5
        %v1620 = vmul.f32 %v779, 0.5
        %v1621 = vmul.f32 %v781, 0.5
        %v1622 = vmul.f32 %v972, 0.5
        %v1623 = vmul.f32 %v974, 0.5
        %v1624 = vmul.f32 %v783, 0.5
        %v1625 = vmul.f32 %v785, 0.5
        %v1626 = vmul.f32 %v976, 0.5
        %v1627 = vmul.f32 %v978, 0.5
        %v1628 = vmul.f32 %v789, 0.5
        %v1629 = vmul.f32 %v791, 0.5
        %v1630 = vmul.f32 %v982, 0.5
        %v1631 = vmul.f32 %v984, 0.5
        %v1632 = vmul.f32 %v793, 0.5
        %v1633 = vmul.f32 %v795, 0.5
        %v1634 = vmul.f32 %v986, 0.5
        %v1635 = vmul.f32 %v988, 0.5
        %v1636 = vmul.f32 %v799, 0.5
        %v1637 = vmul.f32 %v801, 0.5
        %v1638 = vmul.f32 %v992, 0.5
        %v1639 = vmul.f32 %v994, 0.5
        %v1640 = vmul.f32 %v803, 0.5
        %v1641 = vmul.f32 %v805, 0.5
        %v1642 = vmul.f32 %v996, 0.5
        %v1643 = vmul.f32 %v998, 0.5
        %v1644 = vmul.f32 %v809, 0.5
        %v1645 = vmul.f32 %v811, 0.5
        %v1646 = vmul.f32 %v1002, 0.5
        %v1647 = vmul.f32 %v1004, 0.5
        %v1648 = vmul.f32 %v813, 0.5
        %v1649 = vmul.f32 %v815, 0.5
        %v1650 = vmul.f32 %v1006, 0.5
        %v1651 = vmul.f32 %v1008, 0.5
        %v1652 = vmul.f32 %v819, 0.5
        %v1653 = vmul.f32 %v821, 0.5
        %v1654 = vmul.f32 %v1012, 0.5
        %v1655 = vmul.f32 %v1014, 0.5
        %v1656 = vmul.f32 %v823, 0.5
        %v1657 = vmul.f32 %v825, 0.5
        %v1658 = vmul.f32 %v1016, 0.5
        %v1659 = vmul.f32 %v1018, 0.5
        %v1660 = vtanh.pop %v1404
        %v1661 = vtanh.pop %v1405
        %v1662 = vtanh.pop %v1406
        %v1663 = vtanh.pop %v1407
        %v1664 = vtanh.pop %v1408
        %v1665 = vtanh.pop %v1409
        %v1666 = vtanh.pop %v1410
        %v1667 = vtanh.pop %v1411
        %v1668 = vtanh.pop %v1412
        %v1669 = vtanh.pop %v1413
        %v1670 = vtanh.pop %v1414
        %v1671 = vtanh.pop %v1415
        %v1672 = vtanh.pop %v1416
        %v1673 = vtanh.pop %v1417
        %v1674 = vtanh.pop %v1418
        %v1675 = vtanh.pop %v1419
        %v1676 = vtanh.pop %v1420
        %v1677 = vtanh.pop %v1421
        %v1678 = vtanh.pop %v1422
        %v1679 = vtanh.pop %v1423
        %v1680 = vtanh.pop %v1424
        %v1681 = vtanh.pop %v1425
        %v1682 = vtanh.pop %v1426
        %v1683 = vtanh.pop %v1427
        %v1684 = vtanh.pop %v1428
        %v1685 = vtanh.pop %v1429
        %v1686 = vtanh.pop %v1430
        %v1687 = vtanh.pop %v1431
        %v1688 = vtanh.pop %v1432
        %v1689 = vtanh.pop %v1433
        %v1690 = vtanh.pop %v1434
        %v1691 = vtanh.pop %v1435
        %v1692 = vtanh.pop %v1436
        %v1693 = vtanh.pop %v1437
        %v1694 = vtanh.pop %v1438
        %v1695 = vtanh.pop %v1439
        %v1696 = vtanh.pop %v1440
        %v1697 = vtanh.pop %v1441
        %v1698 = vtanh.pop %v1442
        %v1699 = vtanh.pop %v1443
        %v1700 = vtanh.pop %v1444
        %v1701 = vtanh.pop %v1445
        %v1702 = vtanh.pop %v1446
        %v1703 = vtanh.pop %v1447
        %v1704 = vtanh.pop %v1448
        %v1705 = vtanh.pop %v1449
        %v1706 = vtanh.pop %v1450
        %v1707 = vtanh.pop %v1451
        %v1708 = vtanh.pop %v1452
        %v1709 = vtanh.pop %v1453
        %v1710 = vtanh.pop %v1454
        %v1711 = vtanh.pop %v1455
        %v1712 = vtanh.pop %v1456
        %v1713 = vtanh.pop %v1457
        %v1714 = vtanh.pop %v1458
        %v1715 = vtanh.pop %v1459
        %v1716 = vtanh.pop %v1460
        %v1717 = vtanh.pop %v1461
        %v1718 = vtanh.pop %v1462
        %v1719 = vtanh.pop %v1463
        %v1720 = vtanh.pop %v1464
        %v1721 = vtanh.pop %v1465
        %v1722 = vtanh.pop %v1466
        %v1723 = vtanh.pop %v1467
        %v1724 = vtanh.pop %v1468
        %v1725 = vtanh.pop %v1469
        %v1726 = vtanh.pop %v1470
        %v1727 = vtanh.pop %v1471
        %v1728 = vtanh.pop %v1472
        %v1729 = vtanh.pop %v1473
        %v1730 = vtanh.pop %v1474
        %v1731 = vtanh.pop %v1475
        %v1732 = vtanh.pop %v1476
        %v1733 = vtanh.pop %v1477
        %v1734 = vtanh.pop %v1478
        %v1735 = vtanh.pop %v1479
        %v1736 = vtanh.pop %v1480
        %v1737 = vtanh.pop %v1481
        %v1738 = vtanh.pop %v1482
        %v1739 = vtanh.pop %v1483
        %v1740 = vtanh.pop %v1484
        %v1741 = vtanh.pop %v1485
        %v1742 = vtanh.pop %v1486
        %v1743 = vtanh.pop %v1487
        %v1744 = vtanh.pop %v1488
        %v1745 = vtanh.pop %v1489
        %v1746 = vtanh.pop %v1490
        %v1747 = vtanh.pop %v1491
        %v1748 = vtanh.pop %v1492
        %v1749 = vtanh.pop %v1493
        %v1750 = vtanh.pop %v1494
        %v1751 = vtanh.pop %v1495
        %v1752 = vtanh.pop %v1496
        %v1753 = vtanh.pop %v1497
        %v1754 = vtanh.pop %v1498
        %v1755 = vtanh.pop %v1499
        %v1756 = vtanh.pop %v1500
        %v1757 = vtanh.pop %v1501
        %v1758 = vtanh.pop %v1502
        %v1759 = vtanh.pop %v1503
        %v1760 = vtanh.pop %v1504
        %v1761 = vtanh.pop %v1505
        %v1762 = vtanh.pop %v1506
        %v1763 = vtanh.pop %v1507
        %v1764 = vtanh.pop %v1508
        %v1765 = vtanh.pop %v1509
        %v1766 = vtanh.pop %v1510
        %v1767 = vtanh.pop %v1511
        %v1768 = vtanh.pop %v1512
        %v1769 = vtanh.pop %v1513
        %v1770 = vtanh.pop %v1514
        %v1771 = vtanh.pop %v1515
        %v1772 = vtanh.pop %v1516
        %v1773 = vtanh.pop %v1517
        %v1774 = vtanh.pop %v1518
        %v1775 = vtanh.pop %v1519
        %v1776 = vtanh.pop %v1520
        %v1777 = vtanh.pop %v1521
        %v1778 = vtanh.pop %v1522
        %v1779 = vtanh.pop %v1523
        %v1780 = vtanh.pop %v1524
        %v1781 = vtanh.pop %v1525
        %v1782 = vtanh.pop %v1526
        %v1783 = vtanh.pop %v1527
        %v1784 = vtanh.pop %v1528
        %v1785 = vtanh.pop %v1529
        %v1786 = vtanh.pop %v1530
        %v1787 = vtanh.pop %v1531
        %v1788 = vadd.f32 %v1660, 1.0
        %v1789 = vadd.f32 %v1661, 1.0
        %v1790 = vadd.f32 %v1662, 1.0
        %v1791 = vadd.f32 %v1663, 1.0
        %v1792 = vadd.f32 %v1664, 1.0
        %v1793 = vadd.f32 %v1665, 1.0
        %v1794 = vadd.f32 %v1666, 1.0
        %v1795 = vadd.f32 %v1667, 1.0
        %v1796 = vadd.f32 %v1668, 1.0
        %v1797 = vadd.f32 %v1669, 1.0
        %v1798 = vadd.f32 %v1670, 1.0
        %v1799 = vadd.f32 %v1671, 1.0
        %v1800 = vadd.f32 %v1672, 1.0
        %v1801 = vadd.f32 %v1673, 1.0
        %v1802 = vadd.f32 %v1674, 1.0
        %v1803 = vadd.f32 %v1675, 1.0
        %v1804 = vadd.f32 %v1676, 1.0
        %v1805 = vadd.f32 %v1677, 1.0
        %v1806 = vadd.f32 %v1678, 1.0
        %v1807 = vadd.f32 %v1679, 1.0
        %v1808 = vadd.f32 %v1680, 1.0
        %v1809 = vadd.f32 %v1681, 1.0
        %v1810 = vadd.f32 %v1682, 1.0
        %v1811 = vadd.f32 %v1683, 1.0
        %v1812 = vadd.f32 %v1684, 1.0
        %v1813 = vadd.f32 %v1685, 1.0
        %v1814 = vadd.f32 %v1686, 1.0
        %v1815 = vadd.f32 %v1687, 1.0
        %v1816 = vadd.f32 %v1688, 1.0
        %v1817 = vadd.f32 %v1689, 1.0
        %v1818 = vadd.f32 %v1690, 1.0
        %v1819 = vadd.f32 %v1691, 1.0
        %v1820 = vadd.f32 %v1692, 1.0
        %v1821 = vadd.f32 %v1693, 1.0
        %v1822 = vadd.f32 %v1694, 1.0
        %v1823 = vadd.f32 %v1695, 1.0
        %v1824 = vadd.f32 %v1696, 1.0
        %v1825 = vadd.f32 %v1697, 1.0
        %v1826 = vadd.f32 %v1698, 1.0
        %v1827 = vadd.f32 %v1699, 1.0
        %v1828 = vadd.f32 %v1700, 1.0
        %v1829 = vadd.f32 %v1701, 1.0
        %v1830 = vadd.f32 %v1702, 1.0
        %v1831 = vadd.f32 %v1703, 1.0
        %v1832 = vadd.f32 %v1704, 1.0
        %v1833 = vadd.f32 %v1705, 1.0
        %v1834 = vadd.f32 %v1706, 1.0
        %v1835 = vadd.f32 %v1707, 1.0
        %v1836 = vadd.f32 %v1708, 1.0
        %v1837 = vadd.f32 %v1709, 1.0
        %v1838 = vadd.f32 %v1710, 1.0
        %v1839 = vadd.f32 %v1711, 1.0
        %v1840 = vadd.f32 %v1712, 1.0
        %v1841 = vadd.f32 %v1713, 1.0
        %v1842 = vadd.f32 %v1714, 1.0
        %v1843 = vadd.f32 %v1715, 1.0
        %v1844 = vadd.f32 %v1716, 1.0
        %v1845 = vadd.f32 %v1717, 1.0
        %v1846 = vadd.f32 %v1718, 1.0
        %v1847 = vadd.f32 %v1719, 1.0
        %v1848 = vadd.f32 %v1720, 1.0
        %v1849 = vadd.f32 %v1721, 1.0
        %v1850 = vadd.f32 %v1722, 1.0
        %v1851 = vadd.f32 %v1723, 1.0
        %v1852 = vadd.f32 %v1724, 1.0
        %v1853 = vadd.f32 %v1725, 1.0
        %v1854 = vadd.f32 %v1726, 1.0
        %v1855 = vadd.f32 %v1727, 1.0
        %v1856 = vadd.f32 %v1728, 1.0
        %v1857 = vadd.f32 %v1729, 1.0
        %v1858 = vadd.f32 %v1730, 1.0
        %v1859 = vadd.f32 %v1731, 1.0
        %v1860 = vadd.f32 %v1732, 1.0
        %v1861 = vadd.f32 %v1733, 1.0
        %v1862 = vadd.f32 %v1734, 1.0
        %v1863 = vadd.f32 %v1735, 1.0
        %v1864 = vadd.f32 %v1736, 1.0
        %v1865 = vadd.f32 %v1737, 1.0
        %v1866 = vadd.f32 %v1738, 1.0
        %v1867 = vadd.f32 %v1739, 1.0
        %v1868 = vadd.f32 %v1740, 1.0
        %v1869 = vadd.f32 %v1741, 1.0
        %v1870 = vadd.f32 %v1742, 1.0
        %v1871 = vadd.f32 %v1743, 1.0
        %v1872 = vadd.f32 %v1744, 1.0
        %v1873 = vadd.f32 %v1745, 1.0
        %v1874 = vadd.f32 %v1746, 1.0
        %v1875 = vadd.f32 %v1747, 1.0
        %v1876 = vadd.f32 %v1748, 1.0
        %v1877 = vadd.f32 %v1749, 1.0
        %v1878 = vadd.f32 %v1750, 1.0
        %v1879 = vadd.f32 %v1751, 1.0
        %v1880 = vadd.f32 %v1752, 1.0
        %v1881 = vadd.f32 %v1753, 1.0
        %v1882 = vadd.f32 %v1754, 1.0
        %v1883 = vadd.f32 %v1755, 1.0
        %v1884 = vadd.f32 %v1756, 1.0
        %v1885 = vadd.f32 %v1757, 1.0
        %v1886 = vadd.f32 %v1758, 1.0
        %v1887 = vadd.f32 %v1759, 1.0
        %v1888 = vadd.f32 %v1760, 1.0
        %v1889 = vadd.f32 %v1761, 1.0
        %v1890 = vadd.f32 %v1762, 1.0
        %v1891 = vadd.f32 %v1763, 1.0
        %v1892 = vadd.f32 %v1764, 1.0
        %v1893 = vadd.f32 %v1765, 1.0
        %v1894 = vadd.f32 %v1766, 1.0
        %v1895 = vadd.f32 %v1767, 1.0
        %v1896 = vadd.f32 %v1768, 1.0
        %v1897 = vadd.f32 %v1769, 1.0
        %v1898 = vadd.f32 %v1770, 1.0
        %v1899 = vadd.f32 %v1771, 1.0
        %v1900 = vadd.f32 %v1772, 1.0
        %v1901 = vadd.f32 %v1773, 1.0
        %v1902 = vadd.f32 %v1774, 1.0
        %v1903 = vadd.f32 %v1775, 1.0
        %v1904 = vadd.f32 %v1776, 1.0
        %v1905 = vadd.f32 %v1777, 1.0
        %v1906 = vadd.f32 %v1778, 1.0
        %v1907 = vadd.f32 %v1779, 1.0
        %v1908 = vadd.f32 %v1780, 1.0
        %v1909 = vadd.f32 %v1781, 1.0
        %v1910 = vadd.f32 %v1782, 1.0
        %v1911 = vadd.f32 %v1783, 1.0
        %v1912 = vadd.f32 %v1784, 1.0
        %v1913 = vadd.f32 %v1785, 1.0
        %v1914 = vadd.f32 %v1786, 1.0
        %v1915 = vadd.f32 %v1787, 1.0
        %v1916 = vmul.f32 %v1532, %v1788
        %v1917 = vmul.f32 %v1533, %v1789
        %v1918 = vmul.f32 %v1534, %v1790
        %v1919 = vmul.f32 %v1535, %v1791
        %v1920 = vmul.f32 %v1536, %v1792
        %v1921 = vmul.f32 %v1537, %v1793
        %v1922 = vmul.f32 %v1538, %v1794
        %v1923 = vmul.f32 %v1539, %v1795
        %v1924 = vmul.f32 %v1540, %v1796
        %v1925 = vmul.f32 %v1541, %v1797
        %v1926 = vmul.f32 %v1542, %v1798
        %v1927 = vmul.f32 %v1543, %v1799
        %v1928 = vmul.f32 %v1544, %v1800
        %v1929 = vmul.f32 %v1545, %v1801
        %v1930 = vmul.f32 %v1546, %v1802
        %v1931 = vmul.f32 %v1547, %v1803
        %v1932 = vmul.f32 %v1548, %v1804
        %v1933 = vmul.f32 %v1549, %v1805
        %v1934 = vmul.f32 %v1550, %v1806
        %v1935 = vmul.f32 %v1551, %v1807
        %v1936 = vmul.f32 %v1552, %v1808
        %v1937 = vmul.f32 %v1553, %v1809
        %v1938 = vmul.f32 %v1554, %v1810
        %v1939 = vmul.f32 %v1555, %v1811
        %v1940 = vmul.f32 %v1556, %v1812
        %v1941 = vmul.f32 %v1557, %v1813
        %v1942 = vmul.f32 %v1558, %v1814
        %v1943 = vmul.f32 %v1559, %v1815
        %v1944 = vmul.f32 %v1560, %v1816
        %v1945 = vmul.f32 %v1561, %v1817
        %v1946 = vmul.f32 %v1562, %v1818
        %v1947 = vmul.f32 %v1563, %v1819
        %v1948 = vmul.f32 %v1564, %v1820
        %v1949 = vmul.f32 %v1565, %v1821
        %v1950 = vmul.f32 %v1566, %v1822
        %v1951 = vmul.f32 %v1567, %v1823
        %v1952 = vmul.f32 %v1568, %v1824
        %v1953 = vmul.f32 %v1569, %v1825
        %v1954 = vmul.f32 %v1570, %v1826
        %v1955 = vmul.f32 %v1571, %v1827
        %v1956 = vmul.f32 %v1572, %v1828
        %v1957 = vmul.f32 %v1573, %v1829
        %v1958 = vmul.f32 %v1574, %v1830
        %v1959 = vmul.f32 %v1575, %v1831
        %v1960 = vmul.f32 %v1576, %v1832
        %v1961 = vmul.f32 %v1577, %v1833
        %v1962 = vmul.f32 %v1578, %v1834
        %v1963 = vmul.f32 %v1579, %v1835
        %v1964 = vmul.f32 %v1580, %v1836
        %v1965 = vmul.f32 %v1581, %v1837
        %v1966 = vmul.f32 %v1582, %v1838
        %v1967 = vmul.f32 %v1583, %v1839
        %v1968 = vmul.f32 %v1584, %v1840
        %v1969 = vmul.f32 %v1585, %v1841
        %v1970 = vmul.f32 %v1586, %v1842
        %v1971 = vmul.f32 %v1587, %v1843
        %v1972 = vmul.f32 %v1588, %v1844
        %v1973 = vmul.f32 %v1589, %v1845
        %v1974 = vmul.f32 %v1590, %v1846
        %v1975 = vmul.f32 %v1591, %v1847
        %v1976 = vmul.f32 %v1592, %v1848
        %v1977 = vmul.f32 %v1593, %v1849
        %v1978 = vmul.f32 %v1594, %v1850
        %v1979 = vmul.f32 %v1595, %v1851
        %v1980 = vmul.f32 %v1596, %v1852
        %v1981 = vmul.f32 %v1597, %v1853
        %v1982 = vmul.f32 %v1598, %v1854
        %v1983 = vmul.f32 %v1599, %v1855
        %v1984 = vmul.f32 %v1600, %v1856
        %v1985 = vmul.f32 %v1601, %v1857
        %v1986 = vmul.f32 %v1602, %v1858
        %v1987 = vmul.f32 %v1603, %v1859
        %v1988 = vmul.f32 %v1604, %v1860
        %v1989 = vmul.f32 %v1605, %v1861
        %v1990 = vmul.f32 %v1606, %v1862
        %v1991 = vmul.f32 %v1607, %v1863
        %v1992 = vmul.f32 %v1608, %v1864
        %v1993 = vmul.f32 %v1609, %v1865
        %v1994 = vmul.f32 %v1610, %v1866
        %v1995 = vmul.f32 %v1611, %v1867
        %v1996 = vmul.f32 %v1612, %v1868
        %v1997 = vmul.f32 %v1613, %v1869
        %v1998 = vmul.f32 %v1614, %v1870
        %v1999 = vmul.f32 %v1615, %v1871
        %v2000 = vmul.f32 %v1616, %v1872
        %v2001 = vmul.f32 %v1617, %v1873
        %v2002 = vmul.f32 %v1618, %v1874
        %v2003 = vmul.f32 %v1619, %v1875
        %v2004 = vmul.f32 %v1620, %v1876
        %v2005 = vmul.f32 %v1621, %v1877
        %v2006 = vmul.f32 %v1622, %v1878
        %v2007 = vmul.f32 %v1623, %v1879
        %v2008 = vmul.f32 %v1624, %v1880
        %v2009 = vmul.f32 %v1625, %v1881
        %v2010 = vmul.f32 %v1626, %v1882
        %v2011 = vmul.f32 %v1627, %v1883
        %v2012 = vmul.f32 %v1628, %v1884
        %v2013 = vmul.f32 %v1629, %v1885
        %v2014 = vmul.f32 %v1630, %v1886
        %v2015 = vmul.f32 %v1631, %v1887
        %v2016 = vmul.f32 %v1632, %v1888
        %v2017 = vmul.f32 %v1633, %v1889
        %v2018 = vmul.f32 %v1634, %v1890
        %v2019 = vmul.f32 %v1635, %v1891
        %v2020 = vmul.f32 %v1636, %v1892
        %v2021 = vmul.f32 %v1637, %v1893
        %v2022 = vmul.f32 %v1638, %v1894
        %v2023 = vmul.f32 %v1639, %v1895
        %v2024 = vmul.f32 %v1640, %v1896
        %v2025 = vmul.f32 %v1641, %v1897
        %v2026 = vmul.f32 %v1642, %v1898
        %v2027 = vmul.f32 %v1643, %v1899
        %v2028 = vmul.f32 %v1644, %v1900
        %v2029 = vmul.f32 %v1645, %v1901
        %v2030 = vmul.f32 %v1646, %v1902
        %v2031 = vmul.f32 %v1647, %v1903
        %v2032 = vmul.f32 %v1648, %v1904
        %v2033 = vmul.f32 %v1649, %v1905
        %v2034 = vmul.f32 %v1650, %v1906
        %v2035 = vmul.f32 %v1651, %v1907
        %v2036 = vmul.f32 %v1652, %v1908
        %v2037 = vmul.f32 %v1653, %v1909
        %v2038 = vmul.f32 %v1654, %v1910
        %v2039 = vmul.f32 %v1655, %v1911
        %v2040 = vmul.f32 %v1656, %v1912
        %v2041 = vmul.f32 %v1657, %v1913
        %v2042 = vmul.f32 %v1658, %v1914
        %v2043 = vmul.f32 %v1659, %v1915
        %v2044 = vpack.c.bf16 %v1920, %v1916
        %v2045 = vpack.c.bf16 %v1921, %v1917
        %v2046 = vpack.c.bf16 %v1922, %v1918
        %v2047 = vpack.c.bf16 %v1923, %v1919
        %v2048 = vpack.c.bf16 %v1928, %v1924
        %v2049 = vpack.c.bf16 %v1929, %v1925
        %v2050 = vpack.c.bf16 %v1930, %v1926
        %v2051 = vpack.c.bf16 %v1931, %v1927
        %v2052 = vpack.c.bf16 %v1936, %v1932
        %v2053 = vpack.c.bf16 %v1937, %v1933
        %v2054 = vpack.c.bf16 %v1938, %v1934
        %v2055 = vpack.c.bf16 %v1939, %v1935
        %v2056 = vpack.c.bf16 %v1944, %v1940
        %v2057 = vpack.c.bf16 %v1945, %v1941
        %v2058 = vpack.c.bf16 %v1946, %v1942
        %v2059 = vpack.c.bf16 %v1947, %v1943
        %v2060 = vpack.c.bf16 %v1952, %v1948
        %v2061 = vpack.c.bf16 %v1953, %v1949
        %v2062 = vpack.c.bf16 %v1954, %v1950
        %v2063 = vpack.c.bf16 %v1955, %v1951
        %v2064 = vpack.c.bf16 %v1960, %v1956
        %v2065 = vpack.c.bf16 %v1961, %v1957
        %v2066 = vpack.c.bf16 %v1962, %v1958
        %v2067 = vpack.c.bf16 %v1963, %v1959
        %v2068 = vpack.c.bf16 %v1968, %v1964
        %v2069 = vpack.c.bf16 %v1969, %v1965
        %v2070 = vpack.c.bf16 %v1970, %v1966
        %v2071 = vpack.c.bf16 %v1971, %v1967
        %v2072 = vpack.c.bf16 %v1976, %v1972
        %v2073 = vpack.c.bf16 %v1977, %v1973
        %v2074 = vpack.c.bf16 %v1978, %v1974
        %v2075 = vpack.c.bf16 %v1979, %v1975
        %v2076 = vpack.c.bf16 %v1984, %v1980
        %v2077 = vpack.c.bf16 %v1985, %v1981
        %v2078 = vpack.c.bf16 %v1986, %v1982
        %v2079 = vpack.c.bf16 %v1987, %v1983
        %v2080 = vpack.c.bf16 %v1992, %v1988
        %v2081 = vpack.c.bf16 %v1993, %v1989
        %v2082 = vpack.c.bf16 %v1994, %v1990
        %v2083 = vpack.c.bf16 %v1995, %v1991
        %v2084 = vpack.c.bf16 %v2000, %v1996
        %v2085 = vpack.c.bf16 %v2001, %v1997
        %v2086 = vpack.c.bf16 %v2002, %v1998
        %v2087 = vpack.c.bf16 %v2003, %v1999
        %v2088 = vpack.c.bf16 %v2008, %v2004
        %v2089 = vpack.c.bf16 %v2009, %v2005
        %v2090 = vpack.c.bf16 %v2010, %v2006
        %v2091 = vpack.c.bf16 %v2011, %v2007
        %v2092 = vpack.c.bf16 %v2016, %v2012
        %v2093 = vpack.c.bf16 %v2017, %v2013
        %v2094 = vpack.c.bf16 %v2018, %v2014
        %v2095 = vpack.c.bf16 %v2019, %v2015
        %v2096 = vpack.c.bf16 %v2024, %v2020
        %v2097 = vpack.c.bf16 %v2025, %v2021
        %v2098 = vpack.c.bf16 %v2026, %v2022
        %v2099 = vpack.c.bf16 %v2027, %v2023
        %v2100 = vpack.c.bf16 %v2032, %v2028
        %v2101 = vpack.c.bf16 %v2033, %v2029
        %v2102 = vpack.c.bf16 %v2034, %v2030
        %v2103 = vpack.c.bf16 %v2035, %v2031
        %v2104 = vpack.c.bf16 %v2040, %v2036
        %v2105 = vpack.c.bf16 %v2041, %v2037
        %v2106 = vpack.c.bf16 %v2042, %v2038
        %v2107 = vpack.c.bf16 %v2043, %v2039
        %v2108 = vld [vmem:[#allocation7] sm:$0xf]
        %v2109 = vld [vmem:[#allocation7 + $0x4] sm:$0xf]
        %v2110 = vld [vmem:[#allocation7 + $0x8] sm:$0xf]
        %v2111 = vld [vmem:[#allocation7 + $0xc] sm:$0xf]
        %v2112 = vld [vmem:[#allocation7 + $0x10] sm:$0xf]
        %v2113 = vld [vmem:[#allocation7 + $0x14] sm:$0xf]
        %v2114 = vld [vmem:[#allocation7 + $0x18] sm:$0xf]
        %v2115 = vld [vmem:[#allocation7 + $0x1c] sm:$0xf]
        %v2116 = vld [vmem:[#allocation7 + $0x20] sm:$0xf]
        %v2117 = vld [vmem:[#allocation7 + $0x24] sm:$0xf]
        %v2118 = vld [vmem:[#allocation7 + $0x28] sm:$0xf]
        %v2119 = vld [vmem:[#allocation7 + $0x2c] sm:$0xf]
        %v2120 = vld [vmem:[#allocation7 + $0x30] sm:$0xf]
        %v2121 = vld [vmem:[#allocation7 + $0x34] sm:$0xf]
        %v2122 = vld [vmem:[#allocation7 + $0x38] sm:$0xf]
        %v2123 = vld [vmem:[#allocation7 + $0x3c] sm:$0xf]
        %v2124 = vld [vmem:[#allocation7 + $0x40] sm:$0xf]
        %v2125 = vld [vmem:[#allocation7 + $0x44] sm:$0xf]
        %v2126 = vld [vmem:[#allocation7 + $0x48] sm:$0xf]
        %v2127 = vld [vmem:[#allocation7 + $0x4c] sm:$0xf]
        %v2128 = vld [vmem:[#allocation7 + $0x50] sm:$0xf]
        %v2129 = vld [vmem:[#allocation7 + $0x54] sm:$0xf]
        %v2130 = vld [vmem:[#allocation7 + $0x58] sm:$0xf]
        %v2131 = vld [vmem:[#allocation7 + $0x5c] sm:$0xf]
        %v2132 = vld [vmem:[#allocation7 + $0x60] sm:$0xf]
        %v2133 = vld [vmem:[#allocation7 + $0x64] sm:$0xf]
        %v2134 = vld [vmem:[#allocation7 + $0x68] sm:$0xf]
        %v2135 = vld [vmem:[#allocation7 + $0x6c] sm:$0xf]
        %v2136 = vld [vmem:[#allocation7 + $0x70] sm:$0xf]
        %v2137 = vld [vmem:[#allocation7 + $0x74] sm:$0xf]
        %v2138 = vld [vmem:[#allocation7 + $0x78] sm:$0xf]
        %v2139 = vld [vmem:[#allocation7 + $0x7c] sm:$0xf]
        %v2140 = vld [vmem:[#allocation7 + $0x80] sm:$0xf]
        %v2141 = vld [vmem:[#allocation7 + $0x84] sm:$0xf]
        %v2142 = vld [vmem:[#allocation7 + $0x88] sm:$0xf]
        %v2143 = vld [vmem:[#allocation7 + $0x8c] sm:$0xf]
        %v2144 = vld [vmem:[#allocation7 + $0x90] sm:$0xf]
        %v2145 = vld [vmem:[#allocation7 + $0x94] sm:$0xf]
        %v2146 = vld [vmem:[#allocation7 + $0x98] sm:$0xf]
        %v2147 = vld [vmem:[#allocation7 + $0x9c] sm:$0xf]
        %v2148 = vld [vmem:[#allocation7 + $0xa0] sm:$0xf]
        %v2149 = vld [vmem:[#allocation7 + $0xa4] sm:$0xf]
        %v2150 = vld [vmem:[#allocation7 + $0xa8] sm:$0xf]
        %v2151 = vld [vmem:[#allocation7 + $0xac] sm:$0xf]
        %v2152 = vld [vmem:[#allocation7 + $0xb0] sm:$0xf]
        %v2153 = vld [vmem:[#allocation7 + $0xb4] sm:$0xf]
        %v2154 = vld [vmem:[#allocation7 + $0xb8] sm:$0xf]
        %v2155 = vld [vmem:[#allocation7 + $0xbc] sm:$0xf]
        %v2156 = vld [vmem:[#allocation7 + $0xc0] sm:$0xf]
        %v2157 = vld [vmem:[#allocation7 + $0xc4] sm:$0xf]
        %v2158 = vld [vmem:[#allocation7 + $0xc8] sm:$0xf]
        %v2159 = vld [vmem:[#allocation7 + $0xcc] sm:$0xf]
        %v2160 = vld [vmem:[#allocation7 + $0xd0] sm:$0xf]
        %v2161 = vld [vmem:[#allocation7 + $0xd4] sm:$0xf]
        %v2162 = vld [vmem:[#allocation7 + $0xd8] sm:$0xf]
        %v2163 = vld [vmem:[#allocation7 + $0xdc] sm:$0xf]
        %v2164 = vld [vmem:[#allocation7 + $0xe0] sm:$0xf]
        %v2165 = vld [vmem:[#allocation7 + $0xe4] sm:$0xf]
        %v2166 = vld [vmem:[#allocation7 + $0xe8] sm:$0xf]
        %v2167 = vld [vmem:[#allocation7 + $0xec] sm:$0xf]
        %v2168 = vld [vmem:[#allocation7 + $0xf0] sm:$0xf]
        %v2169 = vld [vmem:[#allocation7 + $0xf4] sm:$0xf]
        %v2170 = vld [vmem:[#allocation7 + $0xf8] sm:$0xf]
        %v2171 = vld [vmem:[#allocation7 + $0xfc] sm:$0xf]
        %v2172 = vld [vmem:[%s4] sm:$0x1]
        %v2173 = vunpack.c.l.bf16 %v2172
        %v2174 = vlaneseq
        %v2175 = vshrl.u32 %v2174, 7
        %v2176 = vsub.s32 0, %v2175
        %v2177 = vrot.slane %v2173, %v2176
        %v2242 = vunpack.c.l.b16 %v2108
        %v2243 = vunpack.c.l.b16 %v2109
        %v2244 = vunpack.c.l.b16 %v2110
        %v2245 = vunpack.c.l.b16 %v2111
        %v2246 = vunpack.c.l.b16 %v2112
        %v2247 = vunpack.c.l.b16 %v2113
        %v2248 = vunpack.c.l.b16 %v2114
        %v2249 = vunpack.c.l.b16 %v2115
        %v2250 = vunpack.c.l.b16 %v2116
        %v2251 = vunpack.c.l.b16 %v2117
        %v2252 = vunpack.c.l.b16 %v2118
        %v2253 = vunpack.c.l.b16 %v2119
        %v2254 = vunpack.c.l.b16 %v2120
        %v2255 = vunpack.c.l.b16 %v2121
        %v2256 = vunpack.c.l.b16 %v2122
        %v2257 = vunpack.c.l.b16 %v2123
        %v2258 = vunpack.c.l.b16 %v2124
        %v2259 = vunpack.c.l.b16 %v2125
        %v2260 = vunpack.c.l.b16 %v2126
        %v2261 = vunpack.c.l.b16 %v2127
        %v2262 = vunpack.c.l.b16 %v2128
        %v2263 = vunpack.c.l.b16 %v2129
        %v2264 = vunpack.c.l.b16 %v2130
        %v2265 = vunpack.c.l.b16 %v2131
        %v2266 = vunpack.c.l.b16 %v2132
        %v2267 = vunpack.c.l.b16 %v2133
        %v2268 = vunpack.c.l.b16 %v2134
        %v2269 = vunpack.c.l.b16 %v2135
        %v2270 = vunpack.c.l.b16 %v2136
        %v2271 = vunpack.c.l.b16 %v2137
        %v2272 = vunpack.c.l.b16 %v2138
        %v2273 = vunpack.c.l.b16 %v2139
        %v2274 = vunpack.c.l.b16 %v2140
        %v2275 = vunpack.c.l.b16 %v2141
        %v2276 = vunpack.c.l.b16 %v2142
        %v2277 = vunpack.c.l.b16 %v2143
        %v2278 = vunpack.c.l.b16 %v2144
        %v2279 = vunpack.c.l.b16 %v2145
        %v2280 = vunpack.c.l.b16 %v2146
        %v2281 = vunpack.c.l.b16 %v2147
        %v2282 = vunpack.c.l.b16 %v2148
        %v2283 = vunpack.c.l.b16 %v2149
        %v2284 = vunpack.c.l.b16 %v2150
        %v2285 = vunpack.c.l.b16 %v2151
        %v2286 = vunpack.c.l.b16 %v2152
        %v2287 = vunpack.c.l.b16 %v2153
        %v2288 = vunpack.c.l.b16 %v2154
        %v2289 = vunpack.c.l.b16 %v2155
        %v2290 = vunpack.c.l.b16 %v2156
        %v2291 = vunpack.c.l.b16 %v2157
        %v2292 = vunpack.c.l.b16 %v2158
        %v2293 = vunpack.c.l.b16 %v2159
        %v2294 = vunpack.c.l.b16 %v2160
        %v2295 = vunpack.c.l.b16 %v2161
        %v2296 = vunpack.c.l.b16 %v2162
        %v2297 = vunpack.c.l.b16 %v2163
        %v2298 = vunpack.c.l.b16 %v2164
        %v2299 = vunpack.c.l.b16 %v2165
        %v2300 = vunpack.c.l.b16 %v2166
        %v2301 = vunpack.c.l.b16 %v2167
        %v2302 = vunpack.c.l.b16 %v2168
        %v2303 = vunpack.c.l.b16 %v2169
        %v2304 = vunpack.c.l.b16 %v2170
        %v2305 = vunpack.c.l.b16 %v2171
        %v2306 = vpack.c.b16 %v2243, %v2242
        %v2307 = vpack.c.b16 %v2245, %v2244
        %v2308 = vpack.c.b16 %v2247, %v2246
        %v2309 = vpack.c.b16 %v2249, %v2248
        %v2310 = vpack.c.b16 %v2251, %v2250
        %v2311 = vpack.c.b16 %v2253, %v2252
        %v2312 = vpack.c.b16 %v2255, %v2254
        %v2313 = vpack.c.b16 %v2257, %v2256
        %v2314 = vpack.c.b16 %v2259, %v2258
        %v2315 = vpack.c.b16 %v2261, %v2260
        %v2316 = vpack.c.b16 %v2263, %v2262
        %v2317 = vpack.c.b16 %v2265, %v2264
        %v2318 = vpack.c.b16 %v2267, %v2266
        %v2319 = vpack.c.b16 %v2269, %v2268
        %v2320 = vpack.c.b16 %v2271, %v2270
        %v2321 = vpack.c.b16 %v2273, %v2272
        %v2322 = vpack.c.b16 %v2275, %v2274
        %v2323 = vpack.c.b16 %v2277, %v2276
        %v2324 = vpack.c.b16 %v2279, %v2278
        %v2325 = vpack.c.b16 %v2281, %v2280
        %v2326 = vpack.c.b16 %v2283, %v2282
        %v2327 = vpack.c.b16 %v2285, %v2284
        %v2328 = vpack.c.b16 %v2287, %v2286
        %v2329 = vpack.c.b16 %v2289, %v2288
        %v2330 = vpack.c.b16 %v2291, %v2290
        %v2331 = vpack.c.b16 %v2293, %v2292
        %v2332 = vpack.c.b16 %v2295, %v2294
        %v2333 = vpack.c.b16 %v2297, %v2296
        %v2334 = vpack.c.b16 %v2299, %v2298
        %v2335 = vpack.c.b16 %v2301, %v2300
        %v2336 = vpack.c.b16 %v2303, %v2302
        %v2337 = vpack.c.b16 %v2305, %v2304
        %2370 = vmatprep.subr.bf16.mxu0 0
        %2371 = vmatpush1.bf16.msra.mxu0 %v2306
        %2372 = vmatprep.subr.bf16.mxu0 0
        %2373 = vmatpush1.bf16.msra.mxu0 %v2307
        %2374 = vmatprep.subr.bf16.mxu0 0
        %2375 = vmatpush1.bf16.msra.mxu0 %v2308
        %2376 = vmatprep.subr.bf16.mxu0 0
        %2377 = vmatpush1.bf16.msra.mxu0 %v2309
        %2378 = vmatprep.subr.bf16.mxu0 0
        %2379 = vmatpush1.bf16.msra.mxu0 %v2310
        %2380 = vmatprep.subr.bf16.mxu0 0
        %2381 = vmatpush1.bf16.msra.mxu0 %v2311
        %2382 = vmatprep.subr.bf16.mxu0 0
        %2383 = vmatpush1.bf16.msra.mxu0 %v2312
        %2384 = vmatprep.subr.bf16.mxu0 0
        %2385 = vmatpush1.bf16.msra.mxu0 %v2313
        %2386 = vmatprep.subr.bf16.mxu0 0
        %2387 = vmatpush1.bf16.msra.mxu0 %v2314
        %2388 = vmatprep.subr.bf16.mxu0 0
        %2389 = vmatpush1.bf16.msra.mxu0 %v2315
        %2390 = vmatprep.subr.bf16.mxu0 0
        %2391 = vmatpush1.bf16.msra.mxu0 %v2316
        %2392 = vmatprep.subr.bf16.mxu0 0
        %2393 = vmatpush1.bf16.msra.mxu0 %v2317
        %2394 = vmatprep.subr.bf16.mxu0 0
        %2395 = vmatpush1.bf16.msra.mxu0 %v2318
        %2396 = vmatprep.subr.bf16.mxu0 0
        %2397 = vmatpush1.bf16.msra.mxu0 %v2319
        %2398 = vmatprep.subr.bf16.mxu0 0
        %2399 = vmatpush1.bf16.msra.mxu0 %v2320
        %2400 = vmatprep.subr.bf16.mxu0 0
        %2401 = vmatpush1.bf16.msra.mxu0 %v2321
        %2402 = vmatprep.mubr.bf16.mxu0 %v2045
        %2403 = vmatmul.mubr.bf16.gmra.mrb[0].mxu0 %v2044
        %v2404 = vpop.f32.mrb[0].mxu0
        %v2405 = vadd.f32 %v2177, %v2404
        %v2406 = vpop.f32.mrb[0].mxu0
        %v2407 = vpop.f32.mrb[0].mxu0
        %v2408 = vadd.f32 %v2177, %v2407
        %v2409 = vpop.f32.mrb[0].mxu0
        %2410 = vmatprep.mubr.bf16.mxu0 %v2049
        %2411 = vmatmul.mubr.bf16.gmra.mrb[0].mxu0 %v2048
        %v2412 = vpop.f32.mrb[0].mxu0
        %v2413 = vadd.f32 %v2177, %v2412
        %v2414 = vpop.f32.mrb[0].mxu0
        %v2415 = vpop.f32.mrb[0].mxu0
        %v2416 = vadd.f32 %v2177, %v2415
        %v2417 = vpop.f32.mrb[0].mxu0
        %2418 = vmatprep.mubr.bf16.mxu0 %v2053
        %2419 = vmatmul.mubr.bf16.gmra.mrb[0].mxu0 %v2052
        %v2420 = vpop.f32.mrb[0].mxu0
        %v2421 = vadd.f32 %v2177, %v2420
        %v2422 = vpop.f32.mrb[0].mxu0
        %v2423 = vpop.f32.mrb[0].mxu0
        %v2424 = vadd.f32 %v2177, %v2423
        %v2425 = vpop.f32.mrb[0].mxu0
        %2426 = vmatprep.mubr.bf16.mxu0 %v2057
        %2427 = vmatmul.mubr.bf16.gmra.mrb[0].mxu0 %v2056
        %v2428 = vpop.f32.mrb[0].mxu0
        %v2429 = vadd.f32 %v2177, %v2428
        %v2430 = vpop.f32.mrb[0].mxu0
        %v2431 = vpop.f32.mrb[0].mxu0
        %v2432 = vadd.f32 %v2177, %v2431
        %v2433 = vpop.f32.mrb[0].mxu0
        %2434 = vmatprep.mubr.bf16.mxu0 %v2061
        %2435 = vmatmul.mubr.bf16.gmra.mrb[0].mxu0 %v2060
        %v2436 = vpop.f32.mrb[0].mxu0
        %v2437 = vadd.f32 %v2177, %v2436
        %v2438 = vpop.f32.mrb[0].mxu0
        %v2439 = vpop.f32.mrb[0].mxu0
        %v2440 = vadd.f32 %v2177, %v2439
        %v2441 = vpop.f32.mrb[0].mxu0
        %2442 = vmatprep.mubr.bf16.mxu0 %v2065
        %2443 = vmatmul.mubr.bf16.gmra.mrb[0].mxu0 %v2064
        %v2444 = vpop.f32.mrb[0].mxu0
        %v2445 = vadd.f32 %v2177, %v2444
        %v2446 = vpop.f32.mrb[0].mxu0
        %v2447 = vpop.f32.mrb[0].mxu0
        %v2448 = vadd.f32 %v2177, %v2447
        %v2449 = vpop.f32.mrb[0].mxu0
        %2450 = vmatprep.mubr.bf16.mxu0 %v2069
        %2451 = vmatmul.mubr.bf16.gmra.mrb[0].mxu0 %v2068
        %v2452 = vpop.f32.mrb[0].mxu0
        %v2453 = vadd.f32 %v2177, %v2452
        %v2454 = vpop.f32.mrb[0].mxu0
        %v2455 = vpop.f32.mrb[0].mxu0
        %v2456 = vadd.f32 %v2177, %v2455
        %v2457 = vpop.f32.mrb[0].mxu0
        %2458 = vmatprep.mubr.bf16.mxu0 %v2073
        %2459 = vmatmul.mubr.bf16.gmra.mrb[0].mxu0 %v2072
        %v2460 = vpop.f32.mrb[0].mxu0
        %v2461 = vadd.f32 %v2177, %v2460
        %v2462 = vpop.f32.mrb[0].mxu0
        %v2463 = vpop.f32.mrb[0].mxu0
        %v2464 = vadd.f32 %v2177, %v2463
        %v2465 = vpop.f32.mrb[0].mxu0
        %2466 = vmatprep.mubr.bf16.mxu0 %v2077
        %2467 = vmatmul.mubr.bf16.gmra.mrb[0].mxu0 %v2076
        %v2468 = vpop.f32.mrb[0].mxu0
        %v2469 = vadd.f32 %v2177, %v2468
        %v2470 = vpop.f32.mrb[0].mxu0
        %v2471 = vpop.f32.mrb[0].mxu0
        %v2472 = vadd.f32 %v2177, %v2471
        %v2473 = vpop.f32.mrb[0].mxu0
        %2474 = vmatprep.mubr.bf16.mxu0 %v2081
        %2475 = vmatmul.mubr.bf16.gmra.mrb[0].mxu0 %v2080
        %v2476 = vpop.f32.mrb[0].mxu0
        %v2477 = vadd.f32 %v2177, %v2476
        %v2478 = vpop.f32.mrb[0].mxu0
        %v2479 = vpop.f32.mrb[0].mxu0
        %v2480 = vadd.f32 %v2177, %v2479
        %v2481 = vpop.f32.mrb[0].mxu0
        %2482 = vmatprep.mubr.bf16.mxu0 %v2085
        %2483 = vmatmul.mubr.bf16.gmra.mrb[0].mxu0 %v2084
        %v2484 = vpop.f32.mrb[0].mxu0
        %v2485 = vadd.f32 %v2177, %v2484
        %v2486 = vpop.f32.mrb[0].mxu0
        %v2487 = vpop.f32.mrb[0].mxu0
        %v2488 = vadd.f32 %v2177, %v2487
        %v2489 = vpop.f32.mrb[0].mxu0
        %2490 = vmatprep.mubr.bf16.mxu0 %v2089
        %2491 = vmatmul.mubr.bf16.gmra.mrb[0].mxu0 %v2088
        %v2492 = vpop.f32.mrb[0].mxu0
        %v2493 = vadd.f32 %v2177, %v2492
        %v2494 = vpop.f32.mrb[0].mxu0
        %v2495 = vpop.f32.mrb[0].mxu0
        %v2496 = vadd.f32 %v2177, %v2495
        %v2497 = vpop.f32.mrb[0].mxu0
        %2498 = vmatprep.mubr.bf16.mxu0 %v2093
        %2499 = vmatmul.mubr.bf16.gmra.mrb[0].mxu0 %v2092
        %v2500 = vpop.f32.mrb[0].mxu0
        %v2501 = vadd.f32 %v2177, %v2500
        %v2502 = vpop.f32.mrb[0].mxu0
        %v2503 = vpop.f32.mrb[0].mxu0
        %v2504 = vadd.f32 %v2177, %v2503
        %v2505 = vpop.f32.mrb[0].mxu0
        %2506 = vmatprep.mubr.bf16.mxu0 %v2097
        %2507 = vmatmul.mubr.bf16.gmra.mrb[0].mxu0 %v2096
        %v2508 = vpop.f32.mrb[0].mxu0
        %v2509 = vadd.f32 %v2177, %v2508
        %v2510 = vpop.f32.mrb[0].mxu0
        %v2511 = vpop.f32.mrb[0].mxu0
        %v2512 = vadd.f32 %v2177, %v2511
        %v2513 = vpop.f32.mrb[0].mxu0
        %2514 = vmatprep.mubr.bf16.mxu0 %v2101
        %2515 = vmatmul.mubr.bf16.gmra.mrb[0].mxu0 %v2100
        %v2516 = vpop.f32.mrb[0].mxu0
        %v2517 = vadd.f32 %v2177, %v2516
        %v2518 = vpop.f32.mrb[0].mxu0
        %v2519 = vpop.f32.mrb[0].mxu0
        %v2520 = vadd.f32 %v2177, %v2519
        %v2521 = vpop.f32.mrb[0].mxu0
        %2522 = vmatprep.mubr.bf16.mxu0 %v2105
        %2523 = vmatmul.mubr.bf16.gmra.mrb[0].mxu0 %v2104
        %v2524 = vpop.f32.mrb[0].mxu0
        %v2525 = vadd.f32 %v2177, %v2524
        %v2526 = vpop.f32.mrb[0].mxu0
        %v2527 = vpop.f32.mrb[0].mxu0
        %v2528 = vadd.f32 %v2177, %v2527
        %v2529 = vpop.f32.mrb[0].mxu0
        %2530 = vdwg.mxu0
        %2531 = vmatprep.subr.bf16.mxu0 0
        %2532 = vmatpush1.bf16.msra.mxu0 %v2322
        %2533 = vmatprep.subr.bf16.mxu0 0
        %2534 = vmatpush1.bf16.msra.mxu0 %v2323
        %2535 = vmatprep.subr.bf16.mxu0 0
        %2536 = vmatpush1.bf16.msra.mxu0 %v2324
        %2537 = vmatprep.subr.bf16.mxu0 0
        %2538 = vmatpush1.bf16.msra.mxu0 %v2325
        %2539 = vmatprep.subr.bf16.mxu0 0
        %2540 = vmatpush1.bf16.msra.mxu0 %v2326
        %2541 = vmatprep.subr.bf16.mxu0 0
        %2542 = vmatpush1.bf16.msra.mxu0 %v2327
        %2543 = vmatprep.subr.bf16.mxu0 0
        %2544 = vmatpush1.bf16.msra.mxu0 %v2328
        %2545 = vmatprep.subr.bf16.mxu0 0
        %2546 = vmatpush1.bf16.msra.mxu0 %v2329
        %2547 = vmatprep.subr.bf16.mxu0 0
        %2548 = vmatpush1.bf16.msra.mxu0 %v2330
        %2549 = vmatprep.subr.bf16.mxu0 0
        %2550 = vmatpush1.bf16.msra.mxu0 %v2331
        %2551 = vmatprep.subr.bf16.mxu0 0
        %2552 = vmatpush1.bf16.msra.mxu0 %v2332
        %2553 = vmatprep.subr.bf16.mxu0 0
        %2554 = vmatpush1.bf16.msra.mxu0 %v2333
        %2555 = vmatprep.subr.bf16.mxu0 0
        %2556 = vmatpush1.bf16.msra.mxu0 %v2334
        %2557 = vmatprep.subr.bf16.mxu0 0
        %2558 = vmatpush1.bf16.msra.mxu0 %v2335
        %2559 = vmatprep.subr.bf16.mxu0 0
        %2560 = vmatpush1.bf16.msra.mxu0 %v2336
        %2561 = vmatprep.subr.bf16.mxu0 0
        %2562 = vmatpush1.bf16.msra.mxu0 %v2337
        %2563 = vmatprep.mubr.bf16.mxu0 %v2047
        %2564 = vmatmul.mubr.bf16.gmra.mrb[0].mxu0 %v2046
        %v2565 = vpop.f32.mrb[0].mxu0
        %v2566 = vadd.f32 %v2405, %v2565
        %v2567 = vpop.f32.mrb[0].mxu0
        %v2568 = vpop.f32.mrb[0].mxu0
        %v2569 = vadd.f32 %v2408, %v2568
        %v2570 = vpop.f32.mrb[0].mxu0
        %2571 = vmatprep.mubr.bf16.mxu0 %v2051
        %2572 = vmatmul.mubr.bf16.gmra.mrb[0].mxu0 %v2050
        %v2573 = vpop.f32.mrb[0].mxu0
        %v2574 = vadd.f32 %v2413, %v2573
        %v2575 = vpop.f32.mrb[0].mxu0
        %v2576 = vpop.f32.mrb[0].mxu0
        %v2577 = vadd.f32 %v2416, %v2576
        %v2578 = vpop.f32.mrb[0].mxu0
        %2579 = vmatprep.mubr.bf16.mxu0 %v2055
        %2580 = vmatmul.mubr.bf16.gmra.mrb[0].mxu0 %v2054
        %v2581 = vpop.f32.mrb[0].mxu0
        %v2582 = vadd.f32 %v2421, %v2581
        %v2583 = vpop.f32.mrb[0].mxu0
        %v2584 = vpop.f32.mrb[0].mxu0
        %v2585 = vadd.f32 %v2424, %v2584
        %v2586 = vpop.f32.mrb[0].mxu0
        %2587 = vmatprep.mubr.bf16.mxu0 %v2059
        %2588 = vmatmul.mubr.bf16.gmra.mrb[0].mxu0 %v2058
        %v2589 = vpop.f32.mrb[0].mxu0
        %v2590 = vadd.f32 %v2429, %v2589
        %v2591 = vpop.f32.mrb[0].mxu0
        %v2592 = vpop.f32.mrb[0].mxu0
        %v2593 = vadd.f32 %v2432, %v2592
        %v2594 = vpop.f32.mrb[0].mxu0
        %2595 = vmatprep.mubr.bf16.mxu0 %v2063
        %2596 = vmatmul.mubr.bf16.gmra.mrb[0].mxu0 %v2062
        %v2597 = vpop.f32.mrb[0].mxu0
        %v2598 = vadd.f32 %v2437, %v2597
        %v2599 = vpop.f32.mrb[0].mxu0
        %v2600 = vpop.f32.mrb[0].mxu0
        %v2601 = vadd.f32 %v2440, %v2600
        %v2602 = vpop.f32.mrb[0].mxu0
        %2603 = vmatprep.mubr.bf16.mxu0 %v2067
        %2604 = vmatmul.mubr.bf16.gmra.mrb[0].mxu0 %v2066
        %v2605 = vpop.f32.mrb[0].mxu0
        %v2606 = vadd.f32 %v2445, %v2605
        %v2607 = vpop.f32.mrb[0].mxu0
        %v2608 = vpop.f32.mrb[0].mxu0
        %v2609 = vadd.f32 %v2448, %v2608
        %v2610 = vpop.f32.mrb[0].mxu0
        %2611 = vmatprep.mubr.bf16.mxu0 %v2071
        %2612 = vmatmul.mubr.bf16.gmra.mrb[0].mxu0 %v2070
        %v2613 = vpop.f32.mrb[0].mxu0
        %v2614 = vadd.f32 %v2453, %v2613
        %v2615 = vpop.f32.mrb[0].mxu0
        %v2616 = vpop.f32.mrb[0].mxu0
        %v2617 = vadd.f32 %v2456, %v2616
        %v2618 = vpop.f32.mrb[0].mxu0
        %2619 = vmatprep.mubr.bf16.mxu0 %v2075
        %2620 = vmatmul.mubr.bf16.gmra.mrb[0].mxu0 %v2074
        %v2621 = vpop.f32.mrb[0].mxu0
        %v2622 = vadd.f32 %v2461, %v2621
        %v2623 = vpop.f32.mrb[0].mxu0
        %v2624 = vpop.f32.mrb[0].mxu0
        %v2625 = vadd.f32 %v2464, %v2624
        %v2626 = vpop.f32.mrb[0].mxu0
        %2627 = vmatprep.mubr.bf16.mxu0 %v2079
        %2628 = vmatmul.mubr.bf16.gmra.mrb[0].mxu0 %v2078
        %v2629 = vpop.f32.mrb[0].mxu0
        %v2630 = vadd.f32 %v2469, %v2629
        %v2631 = vpop.f32.mrb[0].mxu0
        %v2632 = vpop.f32.mrb[0].mxu0
        %v2633 = vadd.f32 %v2472, %v2632
        %v2634 = vpop.f32.mrb[0].mxu0
        %2635 = vmatprep.mubr.bf16.mxu0 %v2083
        %2636 = vmatmul.mubr.bf16.gmra.mrb[0].mxu0 %v2082
        %v2637 = vpop.f32.mrb[0].mxu0
        %v2638 = vadd.f32 %v2477, %v2637
        %v2639 = vpop.f32.mrb[0].mxu0
        %v2640 = vpop.f32.mrb[0].mxu0
        %v2641 = vadd.f32 %v2480, %v2640
        %v2642 = vpop.f32.mrb[0].mxu0
        %2643 = vmatprep.mubr.bf16.mxu0 %v2087
        %2644 = vmatmul.mubr.bf16.gmra.mrb[0].mxu0 %v2086
        %v2645 = vpop.f32.mrb[0].mxu0
        %v2646 = vadd.f32 %v2485, %v2645
        %v2647 = vpop.f32.mrb[0].mxu0
        %v2648 = vpop.f32.mrb[0].mxu0
        %v2649 = vadd.f32 %v2488, %v2648
        %v2650 = vpop.f32.mrb[0].mxu0
        %2651 = vmatprep.mubr.bf16.mxu0 %v2091
        %2652 = vmatmul.mubr.bf16.gmra.mrb[0].mxu0 %v2090
        %v2653 = vpop.f32.mrb[0].mxu0
        %v2654 = vadd.f32 %v2493, %v2653
        %v2655 = vpop.f32.mrb[0].mxu0
        %v2656 = vpop.f32.mrb[0].mxu0
        %v2657 = vadd.f32 %v2496, %v2656
        %v2658 = vpop.f32.mrb[0].mxu0
        %2659 = vmatprep.mubr.bf16.mxu0 %v2095
        %2660 = vmatmul.mubr.bf16.gmra.mrb[0].mxu0 %v2094
        %v2661 = vpop.f32.mrb[0].mxu0
        %v2662 = vadd.f32 %v2501, %v2661
        %v2663 = vpop.f32.mrb[0].mxu0
        %v2664 = vpop.f32.mrb[0].mxu0
        %v2665 = vadd.f32 %v2504, %v2664
        %v2666 = vpop.f32.mrb[0].mxu0
        %2667 = vmatprep.mubr.bf16.mxu0 %v2099
        %2668 = vmatmul.mubr.bf16.gmra.mrb[0].mxu0 %v2098
        %v2669 = vpop.f32.mrb[0].mxu0
        %v2670 = vadd.f32 %v2509, %v2669
        %v2671 = vpop.f32.mrb[0].mxu0
        %v2672 = vpop.f32.mrb[0].mxu0
        %v2673 = vadd.f32 %v2512, %v2672
        %v2674 = vpop.f32.mrb[0].mxu0
        %2675 = vmatprep.mubr.bf16.mxu0 %v2103
        %2676 = vmatmul.mubr.bf16.gmra.mrb[0].mxu0 %v2102
        %v2677 = vpop.f32.mrb[0].mxu0
        %v2678 = vadd.f32 %v2517, %v2677
        %v2679 = vpop.f32.mrb[0].mxu0
        %v2680 = vpop.f32.mrb[0].mxu0
        %v2681 = vadd.f32 %v2520, %v2680
        %v2682 = vpop.f32.mrb[0].mxu0
        %2683 = vmatprep.mubr.bf16.mxu0 %v2107
        %2684 = vmatmul.mubr.bf16.gmra.mrb[0].mxu0 %v2106
        %v2685 = vpop.f32.mrb[0].mxu0
        %v2686 = vadd.f32 %v2525, %v2685
        %v2687 = vpop.f32.mrb[0].mxu0
        %v2688 = vpop.f32.mrb[0].mxu0
        %v2689 = vadd.f32 %v2528, %v2688
        %v2690 = vpop.f32.mrb[0].mxu0
        %2691 = vdwg.mxu0
        %v2692 = vpack.c.bf16 %v2569, %v2566
        %v2693 = vpack.c.bf16 %v2577, %v2574
        %v2694 = vpack.c.bf16 %v2585, %v2582
        %v2695 = vpack.c.bf16 %v2593, %v2590
        %v2696 = vpack.c.bf16 %v2601, %v2598
        %v2697 = vpack.c.bf16 %v2609, %v2606
        %v2698 = vpack.c.bf16 %v2617, %v2614
        %v2699 = vpack.c.bf16 %v2625, %v2622
        %v2700 = vpack.c.bf16 %v2633, %v2630
        %v2701 = vpack.c.bf16 %v2641, %v2638
        %v2702 = vpack.c.bf16 %v2649, %v2646
        %v2703 = vpack.c.bf16 %v2657, %v2654
        %v2704 = vpack.c.bf16 %v2665, %v2662
        %v2705 = vpack.c.bf16 %v2673, %v2670
        %v2706 = vpack.c.bf16 %v2681, %v2678
        %v2707 = vpack.c.bf16 %v2689, %v2686
        %v2724 = vunpack.c.l.b16 %v2692
        %v2725 = vunpack.c.h.b16 %v2692
        %v2726 = vunpack.c.l.b16 %v2693
        %v2727 = vunpack.c.h.b16 %v2693
        %v2728 = vunpack.c.l.b16 %v2694
        %v2729 = vunpack.c.h.b16 %v2694
        %v2730 = vunpack.c.l.b16 %v2695
        %v2731 = vunpack.c.h.b16 %v2695
        %v2732 = vunpack.c.l.b16 %v2696
        %v2733 = vunpack.c.h.b16 %v2696
        %v2734 = vunpack.c.l.b16 %v2697
        %v2735 = vunpack.c.h.b16 %v2697
        %v2736 = vunpack.c.l.b16 %v2698
        %v2737 = vunpack.c.h.b16 %v2698
        %v2738 = vunpack.c.l.b16 %v2699
        %v2739 = vunpack.c.h.b16 %v2699
        %v2740 = vunpack.c.l.b16 %v2700
        %v2741 = vunpack.c.h.b16 %v2700
        %v2742 = vunpack.c.l.b16 %v2701
        %v2743 = vunpack.c.h.b16 %v2701
        %v2744 = vunpack.c.l.b16 %v2702
        %v2745 = vunpack.c.h.b16 %v2702
        %v2746 = vunpack.c.l.b16 %v2703
        %v2747 = vunpack.c.h.b16 %v2703
        %v2748 = vunpack.c.l.b16 %v2704
        %v2749 = vunpack.c.h.b16 %v2704
        %v2750 = vunpack.c.l.b16 %v2705
        %v2751 = vunpack.c.h.b16 %v2705
        %v2752 = vunpack.c.l.b16 %v2706
        %v2753 = vunpack.c.h.b16 %v2706
        %v2754 = vunpack.c.l.b16 %v2707
        %v2755 = vunpack.c.h.b16 %v2707
        %v2756 = vpack.c.b16 %v2724, %v2724
        %v2757 = vpack.c.b16 %v2725, %v2725
        %v2758 = vpack.c.b16 %v2726, %v2726
        %v2759 = vpack.c.b16 %v2727, %v2727
        %v2760 = vpack.c.b16 %v2728, %v2728
        %v2761 = vpack.c.b16 %v2729, %v2729
        %v2762 = vpack.c.b16 %v2730, %v2730
        %v2763 = vpack.c.b16 %v2731, %v2731
        %v2764 = vpack.c.b16 %v2732, %v2732
        %v2765 = vpack.c.b16 %v2733, %v2733
        %v2766 = vpack.c.b16 %v2734, %v2734
        %v2767 = vpack.c.b16 %v2735, %v2735
        %v2768 = vpack.c.b16 %v2736, %v2736
        %v2769 = vpack.c.b16 %v2737, %v2737
        %v2770 = vpack.c.b16 %v2738, %v2738
        %v2771 = vpack.c.b16 %v2739, %v2739
        %v2772 = vpack.c.b16 %v2740, %v2740
        %v2773 = vpack.c.b16 %v2741, %v2741
        %v2774 = vpack.c.b16 %v2742, %v2742
        %v2775 = vpack.c.b16 %v2743, %v2743
        %v2776 = vpack.c.b16 %v2744, %v2744
        %v2777 = vpack.c.b16 %v2745, %v2745
        %v2778 = vpack.c.b16 %v2746, %v2746
        %v2779 = vpack.c.b16 %v2747, %v2747
        %v2780 = vpack.c.b16 %v2748, %v2748
        %v2781 = vpack.c.b16 %v2749, %v2749
        %v2782 = vpack.c.b16 %v2750, %v2750
        %v2783 = vpack.c.b16 %v2751, %v2751
        %v2784 = vpack.c.b16 %v2752, %v2752
        %v2785 = vpack.c.b16 %v2753, %v2753
        %v2786 = vpack.c.b16 %v2754, %v2754
        %v2787 = vpack.c.b16 %v2755, %v2755
        %2820 = vst [vmem:[%s271] sm:$0xf] %v2756
        %2821 = vst [vmem:[%s271 + $0x4] sm:$0xf] %v2757
        %2822 = vst [vmem:[%s271 + $0x8] sm:$0xf] %v2758
        %2823 = vst [vmem:[%s271 + $0xc] sm:$0xf] %v2759
        %2824 = vst [vmem:[%s271 + $0x10] sm:$0xf] %v2760
        %2825 = vst [vmem:[%s271 + $0x14] sm:$0xf] %v2761
        %2826 = vst [vmem:[%s271 + $0x18] sm:$0xf] %v2762
        %2827 = vst [vmem:[%s271 + $0x1c] sm:$0xf] %v2763
        %2828 = vst [vmem:[%s271 + $0x20] sm:$0xf] %v2764
        %2829 = vst [vmem:[%s271 + $0x24] sm:$0xf] %v2765
        %2830 = vst [vmem:[%s271 + $0x28] sm:$0xf] %v2766
        %2831 = vst [vmem:[%s271 + $0x2c] sm:$0xf] %v2767
        %2832 = vst [vmem:[%s271 + $0x30] sm:$0xf] %v2768
        %2833 = vst [vmem:[%s271 + $0x34] sm:$0xf] %v2769
        %2834 = vst [vmem:[%s271 + $0x38] sm:$0xf] %v2770
        %2835 = vst [vmem:[%s271 + $0x3c] sm:$0xf] %v2771
        %2836 = vst [vmem:[%s271 + $0x40] sm:$0xf] %v2772
        %2837 = vst [vmem:[%s271 + $0x44] sm:$0xf] %v2773
        %2838 = vst [vmem:[%s271 + $0x48] sm:$0xf] %v2774
        %2839 = vst [vmem:[%s271 + $0x4c] sm:$0xf] %v2775
        %2840 = vst [vmem:[%s271 + $0x50] sm:$0xf] %v2776
        %2841 = vst [vmem:[%s271 + $0x54] sm:$0xf] %v2777
        %2842 = vst [vmem:[%s271 + $0x58] sm:$0xf] %v2778
        %2843 = vst [vmem:[%s271 + $0x5c] sm:$0xf] %v2779
        %2844 = vst [vmem:[%s271 + $0x60] sm:$0xf] %v2780
        %2845 = vst [vmem:[%s271 + $0x64] sm:$0xf] %v2781
        %2846 = vst [vmem:[%s271 + $0x68] sm:$0xf] %v2782
        %2847 = vst [vmem:[%s271 + $0x6c] sm:$0xf] %v2783
        %2848 = vst [vmem:[%s271 + $0x70] sm:$0xf] %v2784
        %2849 = vst [vmem:[%s271 + $0x74] sm:$0xf] %v2785
        %2850 = vst [vmem:[%s271 + $0x78] sm:$0xf] %v2786
        %2851 = vst [vmem:[%s271 + $0x7c] sm:$0xf] %v2787
        %s2852 = sand.u32 %s141, 1
        %s2853 = scalar_lea.sflag [#allocation4], %s2852
        %s2854 = sand.u32 %s141, 1
        %s2855 = smul.addr %s2854, 128
        %s2856 = scalar_lea.vmem [#allocation8], %s2855
        // Predicated region
        $region53: #{tpu_custom_call.1} parent=39 // pred_check
          %p2857 = pneg %p151
        $region54: #{tpu_custom_call.1} parent=39 // pred_check_branch
          %2859 = sbr.rel (%p2857) target = $region56
        $region55: #{tpu_custom_call.1} parent=39 // pred_region
          %s2860 = smul.u32 32, %s23
          %s2862 = ssub.s32 2048, 2048
          %2863 = vsyncadd %s2853, %s2862
          %s2864 = smul.addr %s2860, 64
          %s2865 = scalar_lea.hbm %s5, %s2864
          %s2866 = sshll.u32 %s2856, 4
          %s2867 = int_to_ptr.vmem [resolvable:$true] %s2866
          %2872 = dma.vmem_to_hbm [thread:$0]  %s2867, 2048, %s2865, %s2853, 64, 64, 4
        $region56: #{tpu_custom_call.1} parent=39 // pred_fallthru
          _
      $region40: #{tpu_custom_call.1} parent=5 // pred_fallthru
        _
      %p2873 = scmp.le.s32.totalorder 2, %s18
      // Predicated region
      $region57: #{tpu_custom_call.1} parent=5 // pred_check
        %p2874 = pneg %p2873
      $region58: #{tpu_custom_call.1} parent=5 // pred_check_branch
        %2876 = sbr.rel (%p2874) target = $region60
      $region59: #{tpu_custom_call.1} parent=5 // pred_region
        %s2877 = ssub.s32 %s18, 2
        // Predicated region
        $region61: #{tpu_custom_call.1} parent=59 // pred_check
          %p2878 = pneg %p157
        $region62: #{tpu_custom_call.1} parent=59 // pred_check_branch
          %2880 = sbr.rel (%p2878) target = $region64
        $region63: #{tpu_custom_call.1} parent=59 // pred_region
          %s2881 = sand.u32 %s142, 1
          %s2882 = scalar_lea.sflag [#allocation4], %s2881
          %s2883 = sand.u32 %s142, 1
          %s2884 = smul.addr %s2883, 128
          %s2885 = scalar_lea.vmem [#allocation8], %s2884
          %2886 = dma.done %s2882, 2048
        $region64: #{tpu_custom_call.1} parent=59 // pred_fallthru
          _
      $region60: #{tpu_custom_call.1} parent=5 // pred_fallthru
        _
    $region6: #{tpu_custom_call.1} parent=1 // loop_footer
      %s22 = sadd.s32 1, %s18
    $region7: #{tpu_custom_call.1} parent=1 // loop_footer_branch
      %17 = sbr.rel target = $region3
    $region8: #{tpu_custom_call.1} parent=1 // loop_exit
      _
    %2887 = vsyncpa [#allocation3], 1
    %s2888 = scalar_lea.sflag [#allocation3], 1
    %2889 = vsyncpa %s2888, 1
    %2890 = vsyncpa [#allocation6], 1
    %2891 = vsyncpa [#allocation4], 1
    %s2892 = scalar_lea.sflag [#allocation4], 1
    %2893 = vsyncpa %s2892, 1

</llo_original>
